<compile_context>
chip_gen: v5e
topology: v5e:2x2
jax: 0.10.0
libtpu: 0.0.40
codegen_flags: <defaults>
</compile_context>

<pallas_src>
import math
import functools

import jax
import jax.numpy as jnp
from jax import lax
from jax.experimental import pallas as pl
from jax.experimental.pallas import tpu as pltpu

NUM_KERNELS = 6                        # module default
NUM_CONV_BRANCHES = NUM_KERNELS // 2   # 3
NUM_BRANCHES = NUM_CONV_BRANCHES + 2   # 5 parallel branches averaged at the end


def _inception_kernel(x_ref, w1x1_ref, b1x1_ref, b4_ref,
                      w13_ref, b13_ref, w31_ref, b31_ref, mask_ref,
                      o_ref, *, width):
    f32 = jnp.float32
    cdt = w13_ref.dtype                      # matmul operand dtype (bf16 or f32)
    Cout, HW = o_ref.shape[1], o_ref.shape[2]
    W = width

    x = x_ref[0]                             # (Cin, HW) f32, channels on sublanes

    # Boundary-validity masks for lane-axis shifts; broadcast once (hoisted).
    mL = jnp.broadcast_to(mask_ref[0:1], (Cout, HW))   # left  neighbor exists (w-1)
    mR = jnp.broadcast_to(mask_ref[1:2], (Cout, HW))   # right neighbor exists (w+1)
    mT = jnp.broadcast_to(mask_ref[2:3], (Cout, HW))   # up    neighbor exists (h-1)
    mB = jnp.broadcast_to(mask_ref[3:4], (Cout, HW))   # down  neighbor exists (h+1)

    def rot(a, s):                           # lane rotation; wraps land on masked slots
        return pltpu.roll(a, s % HW, axis=1)

    def taps_w(y):                           # (Cout,HW) -> (3*Cout,HW): cols [w-1, w, w+1]
        return jnp.concatenate([rot(y, 1) * mL, y, rot(y, -1) * mR], axis=0)

    def taps_h(y):                           # rows [h-1, h, h+1]
        return jnp.concatenate([rot(y, W) * mT, y, rot(y, -W) * mB], axis=0)

    def mxu(w, a):                           # bf16/f32 operands, f32 accumulation
        return jnp.dot(w, a.astype(cdt), preferred_element_type=f32)

    # ---- all five 1x1 convs on x fused into one (5*Cout, Cin) @ (Cin, HW) matmul ----
    z = mxu(w1x1_ref[...], x) + b1x1_ref[...]          # (5*Cout, HW) f32

    total = jnp.zeros((Cout, HW), f32)

    # Branches 0..2: 1x1 then (i+1) shared-weight repeats of ([1,3] -> [3,1]),
    # each separable conv as a single K=3*Cout matmul.
    for i in range(NUM_CONV_BRANCHES):
        y = z[i * Cout:(i + 1) * Cout, :]
        for _ in range(i + 1):
            y = mxu(w13_ref[i], taps_w(y)) + b13_ref[i]
            y = mxu(w31_ref[i], taps_h(y)) + b31_ref[i]
        total = total + y

    # Branch 3: plain 1x1 conv (already computed in z).
    total = total + z[3 * Cout:4 * Cout, :]

    # Branch 4: conv1x1(avgpool3x3(x)) == avgpool3x3(W4 @ x) + b4 (pool is linear,
    # bias added after the pool so count_include_pad semantics are preserved).
    # Separable zero-padded 3x3 sum (3 horizontal + 3 vertical taps), /9.
    z4 = z[4 * Cout:5 * Cout, :]                       # W4 @ x, no bias
    hs = z4 + rot(z4, 1) * mL + rot(z4, -1) * mR
    vs = hs + rot(hs, W) * mT + rot(hs, -W) * mB
    total = total + vs * (1.0 / 9.0) + b4_ref[...]

    # Mean over the 5 stacked branches; lane-dense (unmasked) store.
    o_ref[0] = (total * (1.0 / NUM_BRANCHES)).astype(o_ref.dtype)


@functools.partial(jax.jit, static_argnames=("matmul_dtype",))
def inception_down_block(x_nchw, params, matmul_dtype=jnp.bfloat16):
    N, Cin, H, W = x_nchw.shape
    nb = NUM_CONV_BRANCHES
    Cout = params["w3"].shape[0]
    HW = H * W
    mdt = jnp.dtype(matmul_dtype)

    # NCHW kept; free reshape to (N, Cin, H*W) — spatial on the lane axis.
    x = x_nchw.astype(jnp.float32).reshape(N, Cin, HW)

    # ---- host-side weight packing (outside the kernel) ----
    # Fused 1x1 weights: rows = [branch0, branch1, branch2, branch3(w3), branch4(w4)].
    w1x1 = jnp.concatenate(
        [params["w1"].reshape(nb * Cout, Cin), params["w3"], params["w4"]],
        axis=0).astype(mdt)                                        # (5*Cout, Cin)
    b1x1 = jnp.concatenate(
        [params["b1"].reshape(nb * Cout), params["b3"],
         jnp.zeros((Cout,), jnp.float32)],                         # branch-4 bias post-pool
        axis=0).reshape(5 * Cout, 1).astype(jnp.float32)
    b4 = params["b4"].reshape(Cout, 1).astype(jnp.float32)

    def pack_taps(w):   # (nb, Co, Ci, 3) -> (nb, Co, 3*Ci), tap-major along K
        return jnp.transpose(w, (0, 1, 3, 2)).reshape(nb, Cout, 3 * Cout).astype(mdt)

    w13 = pack_taps(params["w13"])
    w31 = pack_taps(params["w31"])
    b13 = params["b13"].reshape(nb, Cout, 1).astype(jnp.float32)
    b31 = params["b31"].reshape(nb, Cout, 1).astype(jnp.float32)

    # Boundary masks for the lane-axis shifts (neighbor-exists indicators).
    idx = jnp.arange(HW, dtype=jnp.int32)
    col, row = idx % W, idx // W
    masks = jnp.stack([col != 0, col != W - 1, row != 0, row != H - 1]
                      ).astype(jnp.float32)                        # (4, HW)

    def full(shape):
        return pl.BlockSpec(shape, lambda n, _nd=len(shape): (0,) * _nd)

    n_rep = sum(i + 1 for i in range(nb))                          # 6 separable pairs / image
    flops = 2 * N * HW * (5 * Cout * Cin + 2 * n_rep * Cout * 3 * Cout)
    weight_bytes = ((w1x1.size + w13.size + w31.size) * mdt.itemsize
                    + (b1x1.size + b13.size + b31.size + b4.size + masks.size) * 4)
    cost = pl.CostEstimate(flops=flops, transcendentals=0,
                           bytes_accessed=4 * N * HW * (Cin + Cout) + weight_bytes)

    out = pl.pallas_call(
        functools.partial(_inception_kernel, width=W),
        out_shape=jax.ShapeDtypeStruct((N, Cout, HW), jnp.float32),
        grid=(N,),
        in_specs=[
            pl.BlockSpec((1, Cin, HW), lambda n: (n, 0, 0)),       # x (one image / step)
            full((5 * Cout, Cin)),                                 # fused 1x1 weights
            full((5 * Cout, 1)),                                   # fused 1x1 biases
            full((Cout, 1)),                                       # b4 (post-pool)
            full((nb, Cout, 3 * Cout)),                            # w13 taps packed along K
            full((nb, Cout, 1)),                                   # b13
            full((nb, Cout, 3 * Cout)),                            # w31 taps packed along K
            full((nb, Cout, 1)),                                   # b31
            full((4, HW)),                                         # boundary masks
        ],
        out_specs=pl.BlockSpec((1, Cout, HW), lambda n: (n, 0, 0)),
        compiler_params=pltpu.CompilerParams(
            dimension_semantics=("parallel",),
            vmem_limit_bytes=32 * 1024 * 1024),
        cost_estimate=cost,
    )(x, w1x1, b1x1, b4, w13, b13, w31, b31, masks)

    return out.reshape(N, Cout, H, W)                              # still NCHW (free reshape)


def init_params(key, cin, cout):
    """Deterministic kaiming_normal(mode='fan_out', relu) init; biases zero (as module)."""
    ks = jax.random.split(key, 5)

    def kn(k, shape, fan_out):
        return math.sqrt(2.0 / fan_out) * jax.random.normal(k, shape, jnp.float32)

    nb = NUM_CONV_BRANCHES
    return {
        "w1":  kn(ks[0], (nb, cout, cin), cout * 1 * 1),       # (out, in)
        "b1":  jnp.zeros((nb, cout), jnp.float32),
        "w13": kn(ks[1], (nb, cout, cout, 3), cout * 1 * 3),   # (out, in, kw)
        "b13": jnp.zeros((nb, cout), jnp.float32),
        "w31": kn(ks[2], (nb, cout, cout, 3), cout * 3 * 1),   # (out, in, kh)
        "b31": jnp.zeros((nb, cout), jnp.float32),
        "w3":  kn(ks[3], (cout, cin), cout),
        "b3":  jnp.zeros((cout,), jnp.float32),
        "w4":  kn(ks[4], (cout, cin), cout),
        "b4":  jnp.zeros((cout,), jnp.float32),
    }


def ref_forward(x_nchw, p):
    """Pure-JAX reference (lax.conv) mirroring the PyTorch forward, for checking."""
    def conv2d(x, w, b, pad):
        y = lax.conv_general_dilated(
            x, w, (1, 1), [(pad[0], pad[0]), (pad[1], pad[1])],
            dimension_numbers=("NCHW", "OIHW", "NCHW"))
        return y + b.reshape(1, -1, 1, 1)

    res = []
    for i in range(NUM_CONV_BRANCHES):
        y = conv2d(x_nchw, p["w1"][i][:, :, None, None], p["b1"][i], (0, 0))
        w13_pt = p["w13"][i][:, :, None, :]                    # (Co,Ci,1,3)
        w31_pt = p["w31"][i][:, :, :, None]                    # (Co,Ci,3,1)
        for _ in range(i + 1):
            y = conv2d(y, w13_pt, p["b13"][i], (0, 1))
            y = conv2d(y, w31_pt, p["b31"][i], (1, 0))
        res.append(y)
    res.append(conv2d(x_nchw, p["w3"][:, :, None, None], p["b3"], (0, 0)))
    pooled = lax.reduce_window(x_nchw, 0.0, lax.add, (1, 1, 3, 3), (1, 1, 1, 1),
                               [(0, 0), (0, 0), (1, 1), (1, 1)]) / 9.0
    res.append(conv2d(pooled, p["w4"][:, :, None, None], p["b4"], (0, 0)))
    return jnp.mean(jnp.stack(res, axis=-1), axis=-1)


if __name__ == "__main__":
    key = jax.random.PRNGKey(0)
    kx, kp, kb = jax.random.split(key, 3)

    N, Cin, H, W = 2, 4, 16, 16
    Cout = 8
    x = jax.random.normal(kx, (N, Cin, H, W), jnp.float32)
    params = init_params(kp, Cin, Cout)
    # Module init zeroes biases; give them small nonzero values so the check also
    # exercises bias handling (incl. the pool/bias ordering in branch 4).
    for name, k in zip(["b1", "b13", "b31", "b3", "b4"], jax.random.split(kb, 5)):
        params[name] = 0.1 * jax.random.normal(k, params[name].shape, jnp.float32)

    ref = ref_forward(x, params)
    scale = float(jnp.max(jnp.abs(ref)))

    # Strict structural check: f32 MXU operands.
    out_f32 = jax.block_until_ready(
        inception_down_block(x, params, matmul_dtype=jnp.float32))
    assert out_f32.shape == (N, Cout, H, W), out_f32.shape
    err_f32 = float(jnp.max(jnp.abs(out_f32 - ref)))
    if err_f32 > 1e-3:
        raise AssertionError(f"f32 kernel mismatch vs reference, max abs err={err_f32}")

    # Perf path (default): bf16 MXU operands, f32 accumulation. Branch 2 chains 7
    # matmuls, so compare with a scale-normalized tolerance.
    out_bf16 = jax.block_until_ready(inception_down_block(x, params))
    assert out_bf16.shape == (N, Cout, H, W), out_bf16.shape
    err_bf16 = float(jnp.max(jnp.abs(out_bf16 - ref)))
    if err_bf16 > 3e-2 * max(1.0, scale):
        raise AssertionError(
            f"bf16 kernel mismatch vs reference, max abs err={err_bf16} (scale={scale})")

    print("KERNEL_OK")
</pallas_src>

<mosaic_0001>
module attributes {stable_mosaic.version = 11 : i64} {
  func.func @_inception_kernel(%arg0: i32, %arg1: memref<1x4x256xf32, #tpu.memory_space<vmem>>, %arg2: memref<40x4xf32, #tpu.memory_space<vmem>>, %arg3: memref<40x1xf32, #tpu.memory_space<vmem>>, %arg4: memref<8x1xf32, #tpu.memory_space<vmem>>, %arg5: memref<3x8x24xf32, #tpu.memory_space<vmem>>, %arg6: memref<3x8x1xf32, #tpu.memory_space<vmem>>, %arg7: memref<3x8x24xf32, #tpu.memory_space<vmem>>, %arg8: memref<3x8x1xf32, #tpu.memory_space<vmem>>, %arg9: memref<4x256xf32, #tpu.memory_space<vmem>>, %arg10: memref<1x8x256xf32, #tpu.memory_space<vmem>>) attributes {dimension_semantics = [#tpu.dimension_semantics<parallel>], iteration_bounds = array<i64: 2>, scalar_prefetch = 0 : i64, scratch_operands = 0 : i64, tpu.core_type = #tpu.core_type<tc>, window_params = [{transform_indices = @transform_0, window_bounds = array<i64: 1, 4, 256>}, {pipeline_mode = #tpu.pipeline_mode<synchronous>, transform_indices = @transform_1, window_bounds = array<i64: 40, 4>}, {pipeline_mode = #tpu.pipeline_mode<synchronous>, transform_indices = @transform_2, window_bounds = array<i64: 40, 1>}, {pipeline_mode = #tpu.pipeline_mode<synchronous>, transform_indices = @transform_3, window_bounds = array<i64: 8, 1>}, {pipeline_mode = #tpu.pipeline_mode<synchronous>, transform_indices = @transform_4, window_bounds = array<i64: 3, 8, 24>}, {pipeline_mode = #tpu.pipeline_mode<synchronous>, transform_indices = @transform_5, window_bounds = array<i64: 3, 8, 1>}, {pipeline_mode = #tpu.pipeline_mode<synchronous>, transform_indices = @transform_6, window_bounds = array<i64: 3, 8, 24>}, {pipeline_mode = #tpu.pipeline_mode<synchronous>, transform_indices = @transform_7, window_bounds = array<i64: 3, 8, 1>}, {pipeline_mode = #tpu.pipeline_mode<synchronous>, transform_indices = @transform_8, window_bounds = array<i64: 4, 256>}, {transform_indices = @transform_9, window_bounds = array<i64: 1, 8, 256>}]} {
    %c0 = arith.constant 0 : index
    %c0_0 = arith.constant 0 : index
    %c0_1 = arith.constant 0 : index
    %0 = vector.load %arg1[%c0, %c0_0, %c0_1] : memref<1x4x256xf32, #tpu.memory_space<vmem>>, vector<1x4x256xf32>
    %1 = vector.shape_cast %0 : vector<1x4x256xf32> to vector<4x256xf32>
    %c0_2 = arith.constant 0 : index
    %c0_3 = arith.constant 0 : index
    %2 = vector.load %arg9[%c0_2, %c0_3] : memref<4x256xf32, #tpu.memory_space<vmem>>, vector<1x256xf32>
    %3 = vector.shape_cast %2 : vector<1x256xf32> to vector<1x256xf32>
    %4 = vector.broadcast %3 : vector<1x256xf32> to vector<8x256xf32>
    %c1 = arith.constant 1 : index
    %c0_4 = arith.constant 0 : index
    %5 = vector.load %arg9[%c1, %c0_4] : memref<4x256xf32, #tpu.memory_space<vmem>>, vector<1x256xf32>
    %6 = vector.shape_cast %5 : vector<1x256xf32> to vector<1x256xf32>
    %7 = vector.broadcast %6 : vector<1x256xf32> to vector<8x256xf32>
    %c2 = arith.constant 2 : index
    %c0_5 = arith.constant 0 : index
    %8 = vector.load %arg9[%c2, %c0_5] : memref<4x256xf32, #tpu.memory_space<vmem>>, vector<1x256xf32>
    %9 = vector.shape_cast %8 : vector<1x256xf32> to vector<1x256xf32>
    %10 = vector.broadcast %9 : vector<1x256xf32> to vector<8x256xf32>
    %c3 = arith.constant 3 : index
    %c0_6 = arith.constant 0 : index
    %11 = vector.load %arg9[%c3, %c0_6] : memref<4x256xf32, #tpu.memory_space<vmem>>, vector<1x256xf32>
    %12 = vector.shape_cast %11 : vector<1x256xf32> to vector<1x256xf32>
    %13 = vector.broadcast %12 : vector<1x256xf32> to vector<8x256xf32>
    %c0_7 = arith.constant 0 : index
    %c0_8 = arith.constant 0 : index
    %14 = vector.load %arg2[%c0_7, %c0_8] : memref<40x4xf32, #tpu.memory_space<vmem>>, vector<40x4xf32>
    %cst = arith.constant dense<0.000000e+00> : vector<40x256xf32>
    %15 = tpu.matmul %14, %1, %cst {dimension_numbers = #tpu.dot_dimension_numbers<[1], [0], [0], [1], [0, 0, 1, 1], [], []>} : vector<40x4xf32>, vector<4x256xf32>, vector<40x256xf32> -> vector<40x256xf32>
    %c0_9 = arith.constant 0 : index
    %c0_10 = arith.constant 0 : index
    %16 = vector.load %arg3[%c0_9, %c0_10] : memref<40x1xf32, #tpu.memory_space<vmem>>, vector<40x1xf32>
    %17 = vector.broadcast %16 : vector<40x1xf32> to vector<40x256xf32>
    %18 = arith.addf %15, %17 : vector<40x256xf32>
    %cst_11 = arith.constant 0.000000e+00 : f32
    %19 = vector.broadcast %cst_11 : f32 to vector<8x256xf32>
    %20 = vector.extract_strided_slice %18 {offsets = [0, 0], sizes = [8, 256], strides = [1, 1]} : vector<40x256xf32> to vector<8x256xf32>
    %c0_12 = arith.constant 0 : index
    %c0_13 = arith.constant 0 : index
    %c0_14 = arith.constant 0 : index
    %21 = vector.load %arg5[%c0_12, %c0_13, %c0_14] : memref<3x8x24xf32, #tpu.memory_space<vmem>>, vector<1x8x24xf32>
    %22 = vector.shape_cast %21 : vector<1x8x24xf32> to vector<8x24xf32>
    %c1_i32 = arith.constant 1 : i32
    %23 = tpu.dynamic_rotate %20 by %c1_i32 dim 1 : vector<8x256xf32>, i32 -> vector<8x256xf32>
    %24 = arith.mulf %23, %4 : vector<8x256xf32>
    %c255_i32 = arith.constant 255 : i32
    %25 = tpu.dynamic_rotate %20 by %c255_i32 dim 1 : vector<8x256xf32>, i32 -> vector<8x256xf32>
    %26 = arith.mulf %25, %7 : vector<8x256xf32>
    %27 = tpu.concatenate %24, %20, %26 in 0 : vector<8x256xf32>, vector<8x256xf32>, vector<8x256xf32> -> vector<24x256xf32>
    %cst_15 = arith.constant dense<0.000000e+00> : vector<8x256xf32>
    %28 = tpu.matmul %22, %27, %cst_15 {dimension_numbers = #tpu.dot_dimension_numbers<[1], [0], [0], [1], [0, 0, 1, 1], [], []>} : vector<8x24xf32>, vector<24x256xf32>, vector<8x256xf32> -> vector<8x256xf32>
    %c0_16 = arith.constant 0 : index
    %c0_17 = arith.constant 0 : index
    %c0_18 = arith.constant 0 : index
    %29 = vector.load %arg6[%c0_16, %c0_17, %c0_18] : memref<3x8x1xf32, #tpu.memory_space<vmem>>, vector<1x8x1xf32>
    %30 = vector.shape_cast %29 : vector<1x8x1xf32> to vector<8x1xf32>
    %31 = vector.broadcast %30 : vector<8x1xf32> to vector<8x256xf32>
    %32 = arith.addf %28, %31 : vector<8x256xf32>
    %c0_19 = arith.constant 0 : index
    %c0_20 = arith.constant 0 : index
    %c0_21 = arith.constant 0 : index
    %33 = vector.load %arg7[%c0_19, %c0_20, %c0_21] : memref<3x8x24xf32, #tpu.memory_space<vmem>>, vector<1x8x24xf32>
    %34 = vector.shape_cast %33 : vector<1x8x24xf32> to vector<8x24xf32>
    %c16_i32 = arith.constant 16 : i32
    %35 = tpu.dynamic_rotate %32 by %c16_i32 dim 1 : vector<8x256xf32>, i32 -> vector<8x256xf32>
    %36 = arith.mulf %35, %10 : vector<8x256xf32>
    %c240_i32 = arith.constant 240 : i32
    %37 = tpu.dynamic_rotate %32 by %c240_i32 dim 1 : vector<8x256xf32>, i32 -> vector<8x256xf32>
    %38 = arith.mulf %37, %13 : vector<8x256xf32>
    %39 = tpu.concatenate %36, %32, %38 in 0 : vector<8x256xf32>, vector<8x256xf32>, vector<8x256xf32> -> vector<24x256xf32>
    %cst_22 = arith.constant dense<0.000000e+00> : vector<8x256xf32>
    %40 = tpu.matmul %34, %39, %cst_22 {dimension_numbers = #tpu.dot_dimension_numbers<[1], [0], [0], [1], [0, 0, 1, 1], [], []>} : vector<8x24xf32>, vector<24x256xf32>, vector<8x256xf32> -> vector<8x256xf32>
    %c0_23 = arith.constant 0 : index
    %c0_24 = arith.constant 0 : index
    %c0_25 = arith.constant 0 : index
    %41 = vector.load %arg8[%c0_23, %c0_24, %c0_25] : memref<3x8x1xf32, #tpu.memory_space<vmem>>, vector<1x8x1xf32>
    %42 = vector.shape_cast %41 : vector<1x8x1xf32> to vector<8x1xf32>
    %43 = vector.broadcast %42 : vector<8x1xf32> to vector<8x256xf32>
    %44 = arith.addf %40, %43 : vector<8x256xf32>
    %45 = arith.addf %19, %44 : vector<8x256xf32>
    %46 = vector.extract_strided_slice %18 {offsets = [8, 0], sizes = [8, 256], strides = [1, 1]} : vector<40x256xf32> to vector<8x256xf32>
    %c1_26 = arith.constant 1 : index
    %c0_27 = arith.constant 0 : index
    %c0_28 = arith.constant 0 : index
    %47 = vector.load %arg5[%c1_26, %c0_27, %c0_28] : memref<3x8x24xf32, #tpu.memory_space<vmem>>, vector<1x8x24xf32>
    %48 = vector.shape_cast %47 : vector<1x8x24xf32> to vector<8x24xf32>
    %c1_i32_29 = arith.constant 1 : i32
    %49 = tpu.dynamic_rotate %46 by %c1_i32_29 dim 1 : vector<8x256xf32>, i32 -> vector<8x256xf32>
    %50 = arith.mulf %49, %4 : vector<8x256xf32>
    %c255_i32_30 = arith.constant 255 : i32
    %51 = tpu.dynamic_rotate %46 by %c255_i32_30 dim 1 : vector<8x256xf32>, i32 -> vector<8x256xf32>
    %52 = arith.mulf %51, %7 : vector<8x256xf32>
    %53 = tpu.concatenate %50, %46, %52 in 0 : vector<8x256xf32>, vector<8x256xf32>, vector<8x256xf32> -> vector<24x256xf32>
    %cst_31 = arith.constant dense<0.000000e+00> : vector<8x256xf32>
    %54 = tpu.matmul %48, %53, %cst_31 {dimension_numbers = #tpu.dot_dimension_numbers<[1], [0], [0], [1], [0, 0, 1, 1], [], []>} : vector<8x24xf32>, vector<24x256xf32>, vector<8x256xf32> -> vector<8x256xf32>
    %c1_32 = arith.constant 1 : index
    %c0_33 = arith.constant 0 : index
    %c0_34 = arith.constant 0 : index
    %55 = vector.load %arg6[%c1_32, %c0_33, %c0_34] : memref<3x8x1xf32, #tpu.memory_space<vmem>>, vector<1x8x1xf32>
    %56 = vector.shape_cast %55 : vector<1x8x1xf32> to vector<8x1xf32>
    %57 = vector.broadcast %56 : vector<8x1xf32> to vector<8x256xf32>
    %58 = arith.addf %54, %57 : vector<8x256xf32>
    %c1_35 = arith.constant 1 : index
    %c0_36 = arith.constant 0 : index
    %c0_37 = arith.constant 0 : index
    %59 = vector.load %arg7[%c1_35, %c0_36, %c0_37] : memref<3x8x24xf32, #tpu.memory_space<vmem>>, vector<1x8x24xf32>
    %60 = vector.shape_cast %59 : vector<1x8x24xf32> to vector<8x24xf32>
    %c16_i32_38 = arith.constant 16 : i32
    %61 = tpu.dynamic_rotate %58 by %c16_i32_38 dim 1 : vector<8x256xf32>, i32 -> vector<8x256xf32>
    %62 = arith.mulf %61, %10 : vector<8x256xf32>
    %c240_i32_39 = arith.constant 240 : i32
    %63 = tpu.dynamic_rotate %58 by %c240_i32_39 dim 1 : vector<8x256xf32>, i32 -> vector<8x256xf32>
    %64 = arith.mulf %63, %13 : vector<8x256xf32>
    %65 = tpu.concatenate %62, %58, %64 in 0 : vector<8x256xf32>, vector<8x256xf32>, vector<8x256xf32> -> vector<24x256xf32>
    %cst_40 = arith.constant dense<0.000000e+00> : vector<8x256xf32>
    %66 = tpu.matmul %60, %65, %cst_40 {dimension_numbers = #tpu.dot_dimension_numbers<[1], [0], [0], [1], [0, 0, 1, 1], [], []>} : vector<8x24xf32>, vector<24x256xf32>, vector<8x256xf32> -> vector<8x256xf32>
    %c1_41 = arith.constant 1 : index
    %c0_42 = arith.constant 0 : index
    %c0_43 = arith.constant 0 : index
    %67 = vector.load %arg8[%c1_41, %c0_42, %c0_43] : memref<3x8x1xf32, #tpu.memory_space<vmem>>, vector<1x8x1xf32>
    %68 = vector.shape_cast %67 : vector<1x8x1xf32> to vector<8x1xf32>
    %69 = vector.broadcast %68 : vector<8x1xf32> to vector<8x256xf32>
    %70 = arith.addf %66, %69 : vector<8x256xf32>
    %c1_44 = arith.constant 1 : index
    %c0_45 = arith.constant 0 : index
    %c0_46 = arith.constant 0 : index
    %71 = vector.load %arg5[%c1_44, %c0_45, %c0_46] : memref<3x8x24xf32, #tpu.memory_space<vmem>>, vector<1x8x24xf32>
    %72 = vector.shape_cast %71 : vector<1x8x24xf32> to vector<8x24xf32>
    %c1_i32_47 = arith.constant 1 : i32
    %73 = tpu.dynamic_rotate %70 by %c1_i32_47 dim 1 : vector<8x256xf32>, i32 -> vector<8x256xf32>
    %74 = arith.mulf %73, %4 : vector<8x256xf32>
    %c255_i32_48 = arith.constant 255 : i32
    %75 = tpu.dynamic_rotate %70 by %c255_i32_48 dim 1 : vector<8x256xf32>, i32 -> vector<8x256xf32>
    %76 = arith.mulf %75, %7 : vector<8x256xf32>
    %77 = tpu.concatenate %74, %70, %76 in 0 : vector<8x256xf32>, vector<8x256xf32>, vector<8x256xf32> -> vector<24x256xf32>
    %cst_49 = arith.constant dense<0.000000e+00> : vector<8x256xf32>
    %78 = tpu.matmul %72, %77, %cst_49 {dimension_numbers = #tpu.dot_dimension_numbers<[1], [0], [0], [1], [0, 0, 1, 1], [], []>} : vector<8x24xf32>, vector<24x256xf32>, vector<8x256xf32> -> vector<8x256xf32>
    %c1_50 = arith.constant 1 : index
    %c0_51 = arith.constant 0 : index
    %c0_52 = arith.constant 0 : index
    %79 = vector.load %arg6[%c1_50, %c0_51, %c0_52] : memref<3x8x1xf32, #tpu.memory_space<vmem>>, vector<1x8x1xf32>
    %80 = vector.shape_cast %79 : vector<1x8x1xf32> to vector<8x1xf32>
    %81 = vector.broadcast %80 : vector<8x1xf32> to vector<8x256xf32>
    %82 = arith.addf %78, %81 : vector<8x256xf32>
    %c1_53 = arith.constant 1 : index
    %c0_54 = arith.constant 0 : index
    %c0_55 = arith.constant 0 : index
    %83 = vector.load %arg7[%c1_53, %c0_54, %c0_55] : memref<3x8x24xf32, #tpu.memory_space<vmem>>, vector<1x8x24xf32>
    %84 = vector.shape_cast %83 : vector<1x8x24xf32> to vector<8x24xf32>
    %c16_i32_56 = arith.constant 16 : i32
    %85 = tpu.dynamic_rotate %82 by %c16_i32_56 dim 1 : vector<8x256xf32>, i32 -> vector<8x256xf32>
    %86 = arith.mulf %85, %10 : vector<8x256xf32>
    %c240_i32_57 = arith.constant 240 : i32
    %87 = tpu.dynamic_rotate %82 by %c240_i32_57 dim 1 : vector<8x256xf32>, i32 -> vector<8x256xf32>
    %88 = arith.mulf %87, %13 : vector<8x256xf32>
    %89 = tpu.concatenate %86, %82, %88 in 0 : vector<8x256xf32>, vector<8x256xf32>, vector<8x256xf32> -> vector<24x256xf32>
    %cst_58 = arith.constant dense<0.000000e+00> : vector<8x256xf32>
    %90 = tpu.matmul %84, %89, %cst_58 {dimension_numbers = #tpu.dot_dimension_numbers<[1], [0], [0], [1], [0, 0, 1, 1], [], []>} : vector<8x24xf32>, vector<24x256xf32>, vector<8x256xf32> -> vector<8x256xf32>
    %c1_59 = arith.constant 1 : index
    %c0_60 = arith.constant 0 : index
    %c0_61 = arith.constant 0 : index
    %91 = vector.load %arg8[%c1_59, %c0_60, %c0_61] : memref<3x8x1xf32, #tpu.memory_space<vmem>>, vector<1x8x1xf32>
    %92 = vector.shape_cast %91 : vector<1x8x1xf32> to vector<8x1xf32>
    %93 = vector.broadcast %92 : vector<8x1xf32> to vector<8x256xf32>
    %94 = arith.addf %90, %93 : vector<8x256xf32>
    %95 = arith.addf %45, %94 : vector<8x256xf32>
    %96 = vector.extract_strided_slice %18 {offsets = [16, 0], sizes = [8, 256], strides = [1, 1]} : vector<40x256xf32> to vector<8x256xf32>
    %c2_62 = arith.constant 2 : index
    %c0_63 = arith.constant 0 : index
    %c0_64 = arith.constant 0 : index
    %97 = vector.load %arg5[%c2_62, %c0_63, %c0_64] : memref<3x8x24xf32, #tpu.memory_space<vmem>>, vector<1x8x24xf32>
    %98 = vector.shape_cast %97 : vector<1x8x24xf32> to vector<8x24xf32>
    %c1_i32_65 = arith.constant 1 : i32
    %99 = tpu.dynamic_rotate %96 by %c1_i32_65 dim 1 : vector<8x256xf32>, i32 -> vector<8x256xf32>
    %100 = arith.mulf %99, %4 : vector<8x256xf32>
    %c255_i32_66 = arith.constant 255 : i32
    %101 = tpu.dynamic_rotate %96 by %c255_i32_66 dim 1 : vector<8x256xf32>, i32 -> vector<8x256xf32>
    %102 = arith.mulf %101, %7 : vector<8x256xf32>
    %103 = tpu.concatenate %100, %96, %102 in 0 : vector<8x256xf32>, vector<8x256xf32>, vector<8x256xf32> -> vector<24x256xf32>
    %cst_67 = arith.constant dense<0.000000e+00> : vector<8x256xf32>
    %104 = tpu.matmul %98, %103, %cst_67 {dimension_numbers = #tpu.dot_dimension_numbers<[1], [0], [0], [1], [0, 0, 1, 1], [], []>} : vector<8x24xf32>, vector<24x256xf32>, vector<8x256xf32> -> vector<8x256xf32>
    %c2_68 = arith.constant 2 : index
    %c0_69 = arith.constant 0 : index
    %c0_70 = arith.constant 0 : index
    %105 = vector.load %arg6[%c2_68, %c0_69, %c0_70] : memref<3x8x1xf32, #tpu.memory_space<vmem>>, vector<1x8x1xf32>
    %106 = vector.shape_cast %105 : vector<1x8x1xf32> to vector<8x1xf32>
    %107 = vector.broadcast %106 : vector<8x1xf32> to vector<8x256xf32>
    %108 = arith.addf %104, %107 : vector<8x256xf32>
    %c2_71 = arith.constant 2 : index
    %c0_72 = arith.constant 0 : index
    %c0_73 = arith.constant 0 : index
    %109 = vector.load %arg7[%c2_71, %c0_72, %c0_73] : memref<3x8x24xf32, #tpu.memory_space<vmem>>, vector<1x8x24xf32>
    %110 = vector.shape_cast %109 : vector<1x8x24xf32> to vector<8x24xf32>
    %c16_i32_74 = arith.constant 16 : i32
    %111 = tpu.dynamic_rotate %108 by %c16_i32_74 dim 1 : vector<8x256xf32>, i32 -> vector<8x256xf32>
    %112 = arith.mulf %111, %10 : vector<8x256xf32>
    %c240_i32_75 = arith.constant 240 : i32
    %113 = tpu.dynamic_rotate %108 by %c240_i32_75 dim 1 : vector<8x256xf32>, i32 -> vector<8x256xf32>
    %114 = arith.mulf %113, %13 : vector<8x256xf32>
    %115 = tpu.concatenate %112, %108, %114 in 0 : vector<8x256xf32>, vector<8x256xf32>, vector<8x256xf32> -> vector<24x256xf32>
    %cst_76 = arith.constant dense<0.000000e+00> : vector<8x256xf32>
    %116 = tpu.matmul %110, %115, %cst_76 {dimension_numbers = #tpu.dot_dimension_numbers<[1], [0], [0], [1], [0, 0, 1, 1], [], []>} : vector<8x24xf32>, vector<24x256xf32>, vector<8x256xf32> -> vector<8x256xf32>
    %c2_77 = arith.constant 2 : index
    %c0_78 = arith.constant 0 : index
    %c0_79 = arith.constant 0 : index
    %117 = vector.load %arg8[%c2_77, %c0_78, %c0_79] : memref<3x8x1xf32, #tpu.memory_space<vmem>>, vector<1x8x1xf32>
    %118 = vector.shape_cast %117 : vector<1x8x1xf32> to vector<8x1xf32>
    %119 = vector.broadcast %118 : vector<8x1xf32> to vector<8x256xf32>
    %120 = arith.addf %116, %119 : vector<8x256xf32>
    %c2_80 = arith.constant 2 : index
    %c0_81 = arith.constant 0 : index
    %c0_82 = arith.constant 0 : index
    %121 = vector.load %arg5[%c2_80, %c0_81, %c0_82] : memref<3x8x24xf32, #tpu.memory_space<vmem>>, vector<1x8x24xf32>
    %122 = vector.shape_cast %121 : vector<1x8x24xf32> to vector<8x24xf32>
    %c1_i32_83 = arith.constant 1 : i32
    %123 = tpu.dynamic_rotate %120 by %c1_i32_83 dim 1 : vector<8x256xf32>, i32 -> vector<8x256xf32>
    %124 = arith.mulf %123, %4 : vector<8x256xf32>
    %c255_i32_84 = arith.constant 255 : i32
    %125 = tpu.dynamic_rotate %120 by %c255_i32_84 dim 1 : vector<8x256xf32>, i32 -> vector<8x256xf32>
    %126 = arith.mulf %125, %7 : vector<8x256xf32>
    %127 = tpu.concatenate %124, %120, %126 in 0 : vector<8x256xf32>, vector<8x256xf32>, vector<8x256xf32> -> vector<24x256xf32>
    %cst_85 = arith.constant dense<0.000000e+00> : vector<8x256xf32>
    %128 = tpu.matmul %122, %127, %cst_85 {dimension_numbers = #tpu.dot_dimension_numbers<[1], [0], [0], [1], [0, 0, 1, 1], [], []>} : vector<8x24xf32>, vector<24x256xf32>, vector<8x256xf32> -> vector<8x256xf32>
    %c2_86 = arith.constant 2 : index
    %c0_87 = arith.constant 0 : index
    %c0_88 = arith.constant 0 : index
    %129 = vector.load %arg6[%c2_86, %c0_87, %c0_88] : memref<3x8x1xf32, #tpu.memory_space<vmem>>, vector<1x8x1xf32>
    %130 = vector.shape_cast %129 : vector<1x8x1xf32> to vector<8x1xf32>
    %131 = vector.broadcast %130 : vector<8x1xf32> to vector<8x256xf32>
    %132 = arith.addf %128, %131 : vector<8x256xf32>
    %c2_89 = arith.constant 2 : index
    %c0_90 = arith.constant 0 : index
    %c0_91 = arith.constant 0 : index
    %133 = vector.load %arg7[%c2_89, %c0_90, %c0_91] : memref<3x8x24xf32, #tpu.memory_space<vmem>>, vector<1x8x24xf32>
    %134 = vector.shape_cast %133 : vector<1x8x24xf32> to vector<8x24xf32>
    %c16_i32_92 = arith.constant 16 : i32
    %135 = tpu.dynamic_rotate %132 by %c16_i32_92 dim 1 : vector<8x256xf32>, i32 -> vector<8x256xf32>
    %136 = arith.mulf %135, %10 : vector<8x256xf32>
    %c240_i32_93 = arith.constant 240 : i32
    %137 = tpu.dynamic_rotate %132 by %c240_i32_93 dim 1 : vector<8x256xf32>, i32 -> vector<8x256xf32>
    %138 = arith.mulf %137, %13 : vector<8x256xf32>
    %139 = tpu.concatenate %136, %132, %138 in 0 : vector<8x256xf32>, vector<8x256xf32>, vector<8x256xf32> -> vector<24x256xf32>
    %cst_94 = arith.constant dense<0.000000e+00> : vector<8x256xf32>
    %140 = tpu.matmul %134, %139, %cst_94 {dimension_numbers = #tpu.dot_dimension_numbers<[1], [0], [0], [1], [0, 0, 1, 1], [], []>} : vector<8x24xf32>, vector<24x256xf32>, vector<8x256xf32> -> vector<8x256xf32>
    %c2_95 = arith.constant 2 : index
    %c0_96 = arith.constant 0 : index
    %c0_97 = arith.constant 0 : index
    %141 = vector.load %arg8[%c2_95, %c0_96, %c0_97] : memref<3x8x1xf32, #tpu.memory_space<vmem>>, vector<1x8x1xf32>
    %142 = vector.shape_cast %141 : vector<1x8x1xf32> to vector<8x1xf32>
    %143 = vector.broadcast %142 : vector<8x1xf32> to vector<8x256xf32>
    %144 = arith.addf %140, %143 : vector<8x256xf32>
    %c2_98 = arith.constant 2 : index
    %c0_99 = arith.constant 0 : index
    %c0_100 = arith.constant 0 : index
    %145 = vector.load %arg5[%c2_98, %c0_99, %c0_100] : memref<3x8x24xf32, #tpu.memory_space<vmem>>, vector<1x8x24xf32>
    %146 = vector.shape_cast %145 : vector<1x8x24xf32> to vector<8x24xf32>
    %c1_i32_101 = arith.constant 1 : i32
    %147 = tpu.dynamic_rotate %144 by %c1_i32_101 dim 1 : vector<8x256xf32>, i32 -> vector<8x256xf32>
    %148 = arith.mulf %147, %4 : vector<8x256xf32>
    %c255_i32_102 = arith.constant 255 : i32
    %149 = tpu.dynamic_rotate %144 by %c255_i32_102 dim 1 : vector<8x256xf32>, i32 -> vector<8x256xf32>
    %150 = arith.mulf %149, %7 : vector<8x256xf32>
    %151 = tpu.concatenate %148, %144, %150 in 0 : vector<8x256xf32>, vector<8x256xf32>, vector<8x256xf32> -> vector<24x256xf32>
    %cst_103 = arith.constant dense<0.000000e+00> : vector<8x256xf32>
    %152 = tpu.matmul %146, %151, %cst_103 {dimension_numbers = #tpu.dot_dimension_numbers<[1], [0], [0], [1], [0, 0, 1, 1], [], []>} : vector<8x24xf32>, vector<24x256xf32>, vector<8x256xf32> -> vector<8x256xf32>
    %c2_104 = arith.constant 2 : index
    %c0_105 = arith.constant 0 : index
    %c0_106 = arith.constant 0 : index
    %153 = vector.load %arg6[%c2_104, %c0_105, %c0_106] : memref<3x8x1xf32, #tpu.memory_space<vmem>>, vector<1x8x1xf32>
    %154 = vector.shape_cast %153 : vector<1x8x1xf32> to vector<8x1xf32>
    %155 = vector.broadcast %154 : vector<8x1xf32> to vector<8x256xf32>
    %156 = arith.addf %152, %155 : vector<8x256xf32>
    %c2_107 = arith.constant 2 : index
    %c0_108 = arith.constant 0 : index
    %c0_109 = arith.constant 0 : index
    %157 = vector.load %arg7[%c2_107, %c0_108, %c0_109] : memref<3x8x24xf32, #tpu.memory_space<vmem>>, vector<1x8x24xf32>
    %158 = vector.shape_cast %157 : vector<1x8x24xf32> to vector<8x24xf32>
    %c16_i32_110 = arith.constant 16 : i32
    %159 = tpu.dynamic_rotate %156 by %c16_i32_110 dim 1 : vector<8x256xf32>, i32 -> vector<8x256xf32>
    %160 = arith.mulf %159, %10 : vector<8x256xf32>
    %c240_i32_111 = arith.constant 240 : i32
    %161 = tpu.dynamic_rotate %156 by %c240_i32_111 dim 1 : vector<8x256xf32>, i32 -> vector<8x256xf32>
    %162 = arith.mulf %161, %13 : vector<8x256xf32>
    %163 = tpu.concatenate %160, %156, %162 in 0 : vector<8x256xf32>, vector<8x256xf32>, vector<8x256xf32> -> vector<24x256xf32>
    %cst_112 = arith.constant dense<0.000000e+00> : vector<8x256xf32>
    %164 = tpu.matmul %158, %163, %cst_112 {dimension_numbers = #tpu.dot_dimension_numbers<[1], [0], [0], [1], [0, 0, 1, 1], [], []>} : vector<8x24xf32>, vector<24x256xf32>, vector<8x256xf32> -> vector<8x256xf32>
    %c2_113 = arith.constant 2 : index
    %c0_114 = arith.constant 0 : index
    %c0_115 = arith.constant 0 : index
    %165 = vector.load %arg8[%c2_113, %c0_114, %c0_115] : memref<3x8x1xf32, #tpu.memory_space<vmem>>, vector<1x8x1xf32>
    %166 = vector.shape_cast %165 : vector<1x8x1xf32> to vector<8x1xf32>
    %167 = vector.broadcast %166 : vector<8x1xf32> to vector<8x256xf32>
    %168 = arith.addf %164, %167 : vector<8x256xf32>
    %169 = arith.addf %95, %168 : vector<8x256xf32>
    %170 = vector.extract_strided_slice %18 {offsets = [24, 0], sizes = [8, 256], strides = [1, 1]} : vector<40x256xf32> to vector<8x256xf32>
    %171 = arith.addf %169, %170 : vector<8x256xf32>
    %172 = vector.extract_strided_slice %18 {offsets = [32, 0], sizes = [8, 256], strides = [1, 1]} : vector<40x256xf32> to vector<8x256xf32>
    %c1_i32_116 = arith.constant 1 : i32
    %173 = tpu.dynamic_rotate %172 by %c1_i32_116 dim 1 : vector<8x256xf32>, i32 -> vector<8x256xf32>
    %174 = arith.mulf %173, %4 : vector<8x256xf32>
    %175 = arith.addf %172, %174 : vector<8x256xf32>
    %c255_i32_117 = arith.constant 255 : i32
    %176 = tpu.dynamic_rotate %172 by %c255_i32_117 dim 1 : vector<8x256xf32>, i32 -> vector<8x256xf32>
    %177 = arith.mulf %176, %7 : vector<8x256xf32>
    %178 = arith.addf %175, %177 : vector<8x256xf32>
    %c16_i32_118 = arith.constant 16 : i32
    %179 = tpu.dynamic_rotate %178 by %c16_i32_118 dim 1 : vector<8x256xf32>, i32 -> vector<8x256xf32>
    %180 = arith.mulf %179, %10 : vector<8x256xf32>
    %181 = arith.addf %178, %180 : vector<8x256xf32>
    %c240_i32_119 = arith.constant 240 : i32
    %182 = tpu.dynamic_rotate %178 by %c240_i32_119 dim 1 : vector<8x256xf32>, i32 -> vector<8x256xf32>
    %183 = arith.mulf %182, %13 : vector<8x256xf32>
    %184 = arith.addf %181, %183 : vector<8x256xf32>
    %cst_120 = arith.constant 0.111111112 : f32
    %185 = vector.broadcast %cst_120 : f32 to vector<8x256xf32>
    %186 = arith.mulf %184, %185 : vector<8x256xf32>
    %187 = arith.addf %171, %186 : vector<8x256xf32>
    %c0_121 = arith.constant 0 : index
    %c0_122 = arith.constant 0 : index
    %188 = vector.load %arg4[%c0_121, %c0_122] : memref<8x1xf32, #tpu.memory_space<vmem>>, vector<8x1xf32>
    %189 = vector.broadcast %188 : vector<8x1xf32> to vector<8x256xf32>
    %190 = arith.addf %187, %189 : vector<8x256xf32>
    %cst_123 = arith.constant 2.000000e-01 : f32
    %191 = vector.broadcast %cst_123 : f32 to vector<8x256xf32>
    %192 = arith.mulf %190, %191 : vector<8x256xf32>
    %c0_124 = arith.constant 0 : index
    %c0_125 = arith.constant 0 : index
    %c0_126 = arith.constant 0 : index
    %193 = vector.load %arg10[%c0_124, %c0_125, %c0_126] : memref<1x8x256xf32, #tpu.memory_space<vmem>>, vector<1x8x256xf32>
    %194 = vector.shape_cast %193 : vector<1x8x256xf32> to vector<8x256xf32>
    %195 = vector.shape_cast %192 : vector<8x256xf32> to vector<1x8x256xf32>
    tpu.vector_store %arg10[%c0_124, %c0_125, %c0_126], %195 {strides = array<i32>} : memref<1x8x256xf32, #tpu.memory_space<vmem>>, vector<1x8x256xf32>,
    return
  }
  func.func @transform_0(%arg0: i32) -> (i32, i32, i32) {
    %c0_i32 = arith.constant 0 : i32
    %c0_i32_0 = arith.constant 0 : i32
    %c0_i32_1 = arith.constant 0 : i32
    return %arg0, %c0_i32, %c0_i32_0 : i32, i32, i32
  }
  func.func @transform_1(%arg0: i32) -> (i32, i32) {
    %c0_i32 = arith.constant 0 : i32
    %c0_i32_0 = arith.constant 0 : i32
    %c0_i32_1 = arith.constant 0 : i32
    return %c0_i32, %c0_i32_0 : i32, i32
  }
  func.func @transform_2(%arg0: i32) -> (i32, i32) {
    %c0_i32 = arith.constant 0 : i32
    %c0_i32_0 = arith.constant 0 : i32
    %c0_i32_1 = arith.constant 0 : i32
    return %c0_i32, %c0_i32_0 : i32, i32
  }
  func.func @transform_3(%arg0: i32) -> (i32, i32) {
    %c0_i32 = arith.constant 0 : i32
    %c0_i32_0 = arith.constant 0 : i32
    %c0_i32_1 = arith.constant 0 : i32
    return %c0_i32, %c0_i32_0 : i32, i32
  }
  func.func @transform_4(%arg0: i32) -> (i32, i32, i32) {
    %c0_i32 = arith.constant 0 : i32
    %c0_i32_0 = arith.constant 0 : i32
    %c0_i32_1 = arith.constant 0 : i32
    %c0_i32_2 = arith.constant 0 : i32
    return %c0_i32, %c0_i32_0, %c0_i32_1 : i32, i32, i32
  }
  func.func @transform_5(%arg0: i32) -> (i32, i32, i32) {
    %c0_i32 = arith.constant 0 : i32
    %c0_i32_0 = arith.constant 0 : i32
    %c0_i32_1 = arith.constant 0 : i32
    %c0_i32_2 = arith.constant 0 : i32
    return %c0_i32, %c0_i32_0, %c0_i32_1 : i32, i32, i32
  }
  func.func @transform_6(%arg0: i32) -> (i32, i32, i32) {
    %c0_i32 = arith.constant 0 : i32
    %c0_i32_0 = arith.constant 0 : i32
    %c0_i32_1 = arith.constant 0 : i32
    %c0_i32_2 = arith.constant 0 : i32
    return %c0_i32, %c0_i32_0, %c0_i32_1 : i32, i32, i32
  }
  func.func @transform_7(%arg0: i32) -> (i32, i32, i32) {
    %c0_i32 = arith.constant 0 : i32
    %c0_i32_0 = arith.constant 0 : i32
    %c0_i32_1 = arith.constant 0 : i32
    %c0_i32_2 = arith.constant 0 : i32
    return %c0_i32, %c0_i32_0, %c0_i32_1 : i32, i32, i32
  }
  func.func @transform_8(%arg0: i32) -> (i32, i32) {
    %c0_i32 = arith.constant 0 : i32
    %c0_i32_0 = arith.constant 0 : i32
    %c0_i32_1 = arith.constant 0 : i32
    return %c0_i32, %c0_i32_0 : i32, i32
  }
  func.func @transform_9(%arg0: i32) -> (i32, i32, i32) {
    %c0_i32 = arith.constant 0 : i32
    %c0_i32_0 = arith.constant 0 : i32
    %c0_i32_1 = arith.constant 0 : i32
    return %arg0, %c0_i32, %c0_i32_0 : i32, i32, i32
  }
}

</mosaic_0001>

<llo_original>
// kernel: inception_down_block.1
$region0: #{inception_down_block.1}
  #allocation0 [shape = 'u32[]', space=smem, size = 0x4, offset = 0x4, fixed_abs, tag = 'smem constant byte address 0x4 - core index']
  #allocation1 [shape = 'u32[72,128]{1,0:T(1,128)}', space=vmem, size = 0x9000, scoped, tag = 'internal scratch']
  %s0 = inlined_call_operand.vmem [shape: f32[2,4,256], index: 0, kind: input, shape index: {}]
  %s1 = inlined_call_operand.vmem [shape: f32[40,4], index: 1, kind: input, shape index: {}]
  %s2 = inlined_call_operand.vmem [shape: f32[40,1], index: 2, kind: input, shape index: {}]
  %s3 = inlined_call_operand.vmem [shape: f32[8,1], index: 3, kind: input, shape index: {}]
  %s4 = inlined_call_operand.vmem [shape: f32[3,8,24], index: 4, kind: input, shape index: {}]
  %s5 = inlined_call_operand.vmem [shape: f32[3,8,1], index: 5, kind: input, shape index: {}]
  %s6 = inlined_call_operand.vmem [shape: f32[3,8,24], index: 6, kind: input, shape index: {}]
  %s7 = inlined_call_operand.vmem [shape: f32[3,8,1], index: 7, kind: input, shape index: {}]
  %s8 = inlined_call_operand.vmem [shape: f32[4,256], index: 8, kind: input, shape index: {}]
  %s9 = inlined_call_operand.vmem [shape: f32[2,8,256], index: 9, kind: output, shape index: {}]
  %s10 = sld [smem:[#allocation0]]
  $region69: #{inception_down_block.1} parent=0
    _
  %s12 = ssub.s32 1, %s10
  %s13 = scalar_select 0, %s12, %s10
  loop: start=0, step=1, limit=4
  $region2: #{inception_down_block.1} parent=0 // loop_pre_header
    _
  $region3: #{inception_down_block.1} parent=0 // loop_header
    %s15 = sphi 0, %s19
    %p16 = scmp.ge.s32.totalorder %s15, 4
    %s25 = sphi 0, %s27
    %s28 = sphi 0, %s25
    %s29 = sphi 0, %s28
    %s45 = sphi 0, %s29
    %s49 = sphi 0, %s49
    %s51 = sphi 0, %s49
    %s52 = sphi 0, %s51
    %s66 = sphi 0, %s52
    %s70 = sphi 0, %s70
    %s72 = sphi 0, %s70
    %s73 = sphi 0, %s72
    %s87 = sphi 0, %s73
    %s91 = sphi 0, %s91
    %s93 = sphi 0, %s91
    %s94 = sphi 0, %s93
    %s108 = sphi 0, %s94
    %s112 = sphi 0, %s112
    %s114 = sphi 0, %s112
    %s115 = sphi 0, %s114
    %s129 = sphi 0, %s115
    %s133 = sphi 0, %s133
    %s135 = sphi 0, %s133
    %s136 = sphi 0, %s135
    %s150 = sphi 0, %s136
    %s154 = sphi 0, %s154
    %s156 = sphi 0, %s154
    %s157 = sphi 0, %s156
    %s171 = sphi 0, %s157
    %s175 = sphi 0, %s175
    %s177 = sphi 0, %s175
    %s178 = sphi 0, %s177
    %s192 = sphi 0, %s178
    %s196 = sphi 0, %s196
    %s198 = sphi 0, %s196
    %s199 = sphi 0, %s198
    %s213 = sphi 0, %s199
    %s219 = sphi 0, %s221
    %s222 = sphi 0, %s219
    %s223 = sphi 0, %s222
    %s239 = sphi 0, %s223
  $region4: #{inception_down_block.1} parent=0 // loop_header_branch
    %18 = sbr.rel (%p16) target = $region8
  $region5: #{inception_down_block.1} parent=0 // loop_body
    %s20 = ssub.s32 %s15, 1
    %s21 = ssub.s32 %s15, 2
    %s22 = sadd.s32 %s15, 1
    %s23 = ssub.s32 %s15, %s22
    %p24 = scmp.eq.s32.totalorder %s23, 0
    %s26 = sadd.s32 %s25, 1
    %s27 = scalar_select %p24, %s25, %s26
    %p30 = pneg %p24
    %p31 = scmp.eq.s32.totalorder %s15, 1
    %p32 = por %p30, %p31
    %p33 = scmp.ne.s32.totalorder %s25, %s28
    %p34 = scmp.eq.s32.totalorder %s15, 0
    %p35 = por %p33, %p34
    %p36 = scmp.ne.s32.totalorder %s25, %s28
    %p37 = scmp.eq.s32.totalorder %s20, 1
    %p38 = por %p36, %p37
    %p39 = scmp.ne.s32.totalorder %s28, %s29
    %p40 = scmp.eq.s32.totalorder %s20, 0
    %p41 = por %p39, %p40
    %p42 = scmp.ne.s32.totalorder %s28, %s29
    %p43 = scmp.eq.s32.totalorder %s21, 1
    %p44 = por %p42, %p43
    %p46 = scmp.ne.s32.totalorder %s29, %s45
    %p47 = scmp.eq.s32.totalorder %s21, 0
    %p48 = por %p46, %p47
    %s50 = sadd.s32 %s49, 1
    %p53 = scmp.eq.s32.totalorder %s15, 1
    %p54 = scmp.ne.s32.totalorder %s49, %s51
    %p55 = scmp.eq.s32.totalorder %s15, 0
    %p56 = por %p54, %p55
    %p57 = scmp.ne.s32.totalorder %s49, %s51
    %p58 = scmp.eq.s32.totalorder %s20, 1
    %p59 = por %p57, %p58
    %p60 = scmp.ne.s32.totalorder %s51, %s52
    %p61 = scmp.eq.s32.totalorder %s20, 0
    %p62 = por %p60, %p61
    %p63 = scmp.ne.s32.totalorder %s51, %s52
    %p64 = scmp.eq.s32.totalorder %s21, 1
    %p65 = por %p63, %p64
    %p67 = scmp.ne.s32.totalorder %s52, %s66
    %p68 = scmp.eq.s32.totalorder %s21, 0
    %p69 = por %p67, %p68
    %s71 = sadd.s32 %s70, 1
    %p74 = scmp.eq.s32.totalorder %s15, 1
    %p75 = scmp.ne.s32.totalorder %s70, %s72
    %p76 = scmp.eq.s32.totalorder %s15, 0
    %p77 = por %p75, %p76
    %p78 = scmp.ne.s32.totalorder %s70, %s72
    %p79 = scmp.eq.s32.totalorder %s20, 1
    %p80 = por %p78, %p79
    %p81 = scmp.ne.s32.totalorder %s72, %s73
    %p82 = scmp.eq.s32.totalorder %s20, 0
    %p83 = por %p81, %p82
    %p84 = scmp.ne.s32.totalorder %s72, %s73
    %p85 = scmp.eq.s32.totalorder %s21, 1
    %p86 = por %p84, %p85
    %p88 = scmp.ne.s32.totalorder %s73, %s87
    %p89 = scmp.eq.s32.totalorder %s21, 0
    %p90 = por %p88, %p89
    %s92 = sadd.s32 %s91, 1
    %p95 = scmp.eq.s32.totalorder %s15, 1
    %p96 = scmp.ne.s32.totalorder %s91, %s93
    %p97 = scmp.eq.s32.totalorder %s15, 0
    %p98 = por %p96, %p97
    %p99 = scmp.ne.s32.totalorder %s91, %s93
    %p100 = scmp.eq.s32.totalorder %s20, 1
    %p101 = por %p99, %p100
    %p102 = scmp.ne.s32.totalorder %s93, %s94
    %p103 = scmp.eq.s32.totalorder %s20, 0
    %p104 = por %p102, %p103
    %p105 = scmp.ne.s32.totalorder %s93, %s94
    %p106 = scmp.eq.s32.totalorder %s21, 1
    %p107 = por %p105, %p106
    %p109 = scmp.ne.s32.totalorder %s94, %s108
    %p110 = scmp.eq.s32.totalorder %s21, 0
    %p111 = por %p109, %p110
    %s113 = sadd.s32 %s112, 1
    %p116 = scmp.eq.s32.totalorder %s15, 1
    %p117 = scmp.ne.s32.totalorder %s112, %s114
    %p118 = scmp.eq.s32.totalorder %s15, 0
    %p119 = por %p117, %p118
    %p120 = scmp.ne.s32.totalorder %s112, %s114
    %p121 = scmp.eq.s32.totalorder %s20, 1
    %p122 = por %p120, %p121
    %p123 = scmp.ne.s32.totalorder %s114, %s115
    %p124 = scmp.eq.s32.totalorder %s20, 0
    %p125 = por %p123, %p124
    %p126 = scmp.ne.s32.totalorder %s114, %s115
    %p127 = scmp.eq.s32.totalorder %s21, 1
    %p128 = por %p126, %p127
    %p130 = scmp.ne.s32.totalorder %s115, %s129
    %p131 = scmp.eq.s32.totalorder %s21, 0
    %p132 = por %p130, %p131
    %s134 = sadd.s32 %s133, 1
    %p137 = scmp.eq.s32.totalorder %s15, 1
    %p138 = scmp.ne.s32.totalorder %s133, %s135
    %p139 = scmp.eq.s32.totalorder %s15, 0
    %p140 = por %p138, %p139
    %p141 = scmp.ne.s32.totalorder %s133, %s135
    %p142 = scmp.eq.s32.totalorder %s20, 1
    %p143 = por %p141, %p142
    %p144 = scmp.ne.s32.totalorder %s135, %s136
    %p145 = scmp.eq.s32.totalorder %s20, 0
    %p146 = por %p144, %p145
    %p147 = scmp.ne.s32.totalorder %s135, %s136
    %p148 = scmp.eq.s32.totalorder %s21, 1
    %p149 = por %p147, %p148
    %p151 = scmp.ne.s32.totalorder %s136, %s150
    %p152 = scmp.eq.s32.totalorder %s21, 0
    %p153 = por %p151, %p152
    %s155 = sadd.s32 %s154, 1
    %p158 = scmp.eq.s32.totalorder %s15, 1
    %p159 = scmp.ne.s32.totalorder %s154, %s156
    %p160 = scmp.eq.s32.totalorder %s15, 0
    %p161 = por %p159, %p160
    %p162 = scmp.ne.s32.totalorder %s154, %s156
    %p163 = scmp.eq.s32.totalorder %s20, 1
    %p164 = por %p162, %p163
    %p165 = scmp.ne.s32.totalorder %s156, %s157
    %p166 = scmp.eq.s32.totalorder %s20, 0
    %p167 = por %p165, %p166
    %p168 = scmp.ne.s32.totalorder %s156, %s157
    %p169 = scmp.eq.s32.totalorder %s21, 1
    %p170 = por %p168, %p169
    %p172 = scmp.ne.s32.totalorder %s157, %s171
    %p173 = scmp.eq.s32.totalorder %s21, 0
    %p174 = por %p172, %p173
    %s176 = sadd.s32 %s175, 1
    %p179 = scmp.eq.s32.totalorder %s15, 1
    %p180 = scmp.ne.s32.totalorder %s175, %s177
    %p181 = scmp.eq.s32.totalorder %s15, 0
    %p182 = por %p180, %p181
    %p183 = scmp.ne.s32.totalorder %s175, %s177
    %p184 = scmp.eq.s32.totalorder %s20, 1
    %p185 = por %p183, %p184
    %p186 = scmp.ne.s32.totalorder %s177, %s178
    %p187 = scmp.eq.s32.totalorder %s20, 0
    %p188 = por %p186, %p187
    %p189 = scmp.ne.s32.totalorder %s177, %s178
    %p190 = scmp.eq.s32.totalorder %s21, 1
    %p191 = por %p189, %p190
    %p193 = scmp.ne.s32.totalorder %s178, %s192
    %p194 = scmp.eq.s32.totalorder %s21, 0
    %p195 = por %p193, %p194
    %s197 = sadd.s32 %s196, 1
    %p200 = scmp.eq.s32.totalorder %s15, 1
    %p201 = scmp.ne.s32.totalorder %s196, %s198
    %p202 = scmp.eq.s32.totalorder %s15, 0
    %p203 = por %p201, %p202
    %p204 = scmp.ne.s32.totalorder %s196, %s198
    %p205 = scmp.eq.s32.totalorder %s20, 1
    %p206 = por %p204, %p205
    %p207 = scmp.ne.s32.totalorder %s198, %s199
    %p208 = scmp.eq.s32.totalorder %s20, 0
    %p209 = por %p207, %p208
    %p210 = scmp.ne.s32.totalorder %s198, %s199
    %p211 = scmp.eq.s32.totalorder %s21, 1
    %p212 = por %p210, %p211
    %p214 = scmp.ne.s32.totalorder %s199, %s213
    %p215 = scmp.eq.s32.totalorder %s21, 0
    %p216 = por %p214, %p215
    %s217 = ssub.s32 %s15, %s22
    %p218 = scmp.eq.s32.totalorder %s217, 0
    %s220 = sadd.s32 %s219, 1
    %s221 = scalar_select %p218, %s219, %s220
    %p224 = pneg %p218
    %p225 = scmp.eq.s32.totalorder %s15, 1
    %p226 = por %p224, %p225
    %p227 = scmp.ne.s32.totalorder %s219, %s222
    %p228 = scmp.eq.s32.totalorder %s15, 0
    %p229 = por %p227, %p228
    %p230 = scmp.ne.s32.totalorder %s219, %s222
    %p231 = scmp.eq.s32.totalorder %s20, 1
    %p232 = por %p230, %p231
    %p233 = scmp.ne.s32.totalorder %s222, %s223
    %p234 = scmp.eq.s32.totalorder %s20, 0
    %p235 = por %p233, %p234
    %p236 = scmp.ne.s32.totalorder %s222, %s223
    %p237 = scmp.eq.s32.totalorder %s21, 1
    %p238 = por %p236, %p237
    %p240 = scmp.ne.s32.totalorder %s223, %s239
    %p241 = scmp.eq.s32.totalorder %s21, 0
    %p242 = por %p240, %p241
    %p243 = scmp.le.s32.totalorder 1, %s15
    %p244 = scmp.lt.s32.totalorder %s15, 3
    %p245 = pnand %p243, %p244
    %p246 = pneg %p245
    // Predicated region
    $region9: #{inception_down_block.1} parent=5 // pred_check
      _
    $region10: #{inception_down_block.1} parent=5 // pred_check_branch
      %248 = sbr.rel (%p245) target = $region12
    $region11: #{inception_down_block.1} parent=5 // pred_region
      %s249 = ssub.s32 %s15, 1
      // Predicated region
      $region13: #{inception_down_block.1} parent=11 // pred_check
        %p250 = pneg %p62
      $region14: #{inception_down_block.1} parent=11 // pred_check_branch
        %252 = sbr.rel (%p250) target = $region16
      $region15: #{inception_down_block.1} parent=11 // pred_region
        _
      $region16: #{inception_down_block.1} parent=11 // pred_fallthru
        _
      // Predicated region
      $region17: #{inception_down_block.1} parent=11 // pred_check
        %p253 = pneg %p83
      $region18: #{inception_down_block.1} parent=11 // pred_check_branch
        %255 = sbr.rel (%p253) target = $region20
      $region19: #{inception_down_block.1} parent=11 // pred_region
        _
      $region20: #{inception_down_block.1} parent=11 // pred_fallthru
        _
      // Predicated region
      $region21: #{inception_down_block.1} parent=11 // pred_check
        %p256 = pneg %p104
      $region22: #{inception_down_block.1} parent=11 // pred_check_branch
        %258 = sbr.rel (%p256) target = $region24
      $region23: #{inception_down_block.1} parent=11 // pred_region
        _
      $region24: #{inception_down_block.1} parent=11 // pred_fallthru
        _
      // Predicated region
      $region25: #{inception_down_block.1} parent=11 // pred_check
        %p259 = pneg %p125
      $region26: #{inception_down_block.1} parent=11 // pred_check_branch
        %261 = sbr.rel (%p259) target = $region28
      $region27: #{inception_down_block.1} parent=11 // pred_region
        _
      $region28: #{inception_down_block.1} parent=11 // pred_fallthru
        _
      // Predicated region
      $region29: #{inception_down_block.1} parent=11 // pred_check
        %p262 = pneg %p146
      $region30: #{inception_down_block.1} parent=11 // pred_check_branch
        %264 = sbr.rel (%p262) target = $region32
      $region31: #{inception_down_block.1} parent=11 // pred_region
        _
      $region32: #{inception_down_block.1} parent=11 // pred_fallthru
        _
      // Predicated region
      $region33: #{inception_down_block.1} parent=11 // pred_check
        %p265 = pneg %p167
      $region34: #{inception_down_block.1} parent=11 // pred_check_branch
        %267 = sbr.rel (%p265) target = $region36
      $region35: #{inception_down_block.1} parent=11 // pred_region
        _
      $region36: #{inception_down_block.1} parent=11 // pred_fallthru
        _
      // Predicated region
      $region37: #{inception_down_block.1} parent=11 // pred_check
        %p268 = pneg %p188
      $region38: #{inception_down_block.1} parent=11 // pred_check_branch
        %270 = sbr.rel (%p268) target = $region40
      $region39: #{inception_down_block.1} parent=11 // pred_region
        _
      $region40: #{inception_down_block.1} parent=11 // pred_fallthru
        _
      // Predicated region
      $region41: #{inception_down_block.1} parent=11 // pred_check
        %p271 = pneg %p209
      $region42: #{inception_down_block.1} parent=11 // pred_check_branch
        %273 = sbr.rel (%p271) target = $region44
      $region43: #{inception_down_block.1} parent=11 // pred_region
        _
      $region44: #{inception_down_block.1} parent=11 // pred_fallthru
        _
    $region12: #{inception_down_block.1} parent=5 // pred_fallthru
      _
    %p274 = scmp.lt.s32.totalorder %s15, 2
    // Predicated region
    $region45: #{inception_down_block.1} parent=5 // pred_check
      %p275 = pneg %p274
    $region46: #{inception_down_block.1} parent=5 // pred_check_branch
      %277 = sbr.rel (%p275) target = $region48
    $region47: #{inception_down_block.1} parent=5 // pred_region
      // Predicated region
      $region49: #{inception_down_block.1} parent=47 // pred_check
        %p278 = pneg %p35
      $region50: #{inception_down_block.1} parent=47 // pred_check_branch
        %280 = sbr.rel (%p278) target = $region52
      $region51: #{inception_down_block.1} parent=47 // pred_region
        %p281 = scmp.lt.s32.totalorder %s15, 1
        %s282 = scalar_select %p281, %s15, 1
        %s283 = smul.addr %s282, 2
        %s284 = smul.addr %s283, 4
        %s285 = scalar_lea.vmem %s0, %s284
      $region52: #{inception_down_block.1} parent=47 // pred_fallthru
        _
    $region48: #{inception_down_block.1} parent=5 // pred_fallthru
      _
    %p286 = scmp.le.s32.totalorder 1, %s15
    %p287 = scmp.lt.s32.totalorder %s15, 3
    %p288 = pnand %p286, %p287
    %p289 = pneg %p288
    // Predicated region
    $region53: #{inception_down_block.1} parent=5 // pred_check
      _
    $region54: #{inception_down_block.1} parent=5 // pred_check_branch
      %291 = sbr.rel (%p288) target = $region56
    $region55: #{inception_down_block.1} parent=5 // pred_region
      %s292 = ssub.s32 %s15, 1
      %p293 = scmp.lt.s32.totalorder %s20, 1
      %s294 = scalar_select %p293, %s20, 1
      %s295 = smul.addr %s294, 2
      %s296 = smul.addr %s295, 4
      %s297 = scalar_lea.vmem %s0, %s296
      %p298 = pneg %p41
      %p299 = pneg %p38
      %p300 = pneg %p62
      %p301 = pneg %p59
      %p302 = pneg %p83
      %p303 = pneg %p80
      %p304 = pneg %p104
      %p305 = pneg %p101
      %p306 = pneg %p125
      %p307 = pneg %p122
      %p308 = pneg %p146
      %p309 = pneg %p143
      %p310 = pneg %p167
      %p311 = pneg %p164
      %p312 = pneg %p188
      %p313 = pneg %p185
      %p314 = pneg %p209
      %p315 = pneg %p206
      %p316 = pneg %p235
      %p317 = pneg %p232
      %p318 = scmp.lt.s32.totalorder %s20, 1
      %s319 = scalar_select %p318, %s20, 1
      %s320 = smul.addr %s319, 2
      %s321 = smul.addr %s320, 8
      %s322 = scalar_lea.vmem %s9, %s321
      %p323 = scmp.lt.s32.totalorder %s20, 1
      %s324 = scalar_select %p323, %s20, 1
      %s325 = smul.addr %s324, 2
      %s326 = smul.addr %s325, 4
      %s327 = scalar_lea.vmem %s0, %s326
      %p328 = scmp.lt.s32.totalorder %s20, 1
      %s329 = scalar_select %p328, %s20, 1
      %s330 = smul.addr %s329, 2
      %s331 = smul.addr %s330, 8
      %s332 = scalar_lea.vmem %s9, %s331
      %v333 = vld [vmem:[%s327] sm:$0xff]
      %v334 = vld [vmem:[%s8] ss:$4 sm:$0x3]
      %v336 = vperm.slane %v334, 0
      %v337 = vperm.slane %v334, 1
      %s340 = scalar_lea.vmem %s8, 1
      %v341 = vld [vmem:[%s340] ss:$4 sm:$0x3]
      %v343 = vperm.slane %v341, 0
      %v344 = vperm.slane %v341, 1
      %s347 = scalar_lea.vmem %s8, 2
      %v348 = vld [vmem:[%s347] ss:$4 sm:$0x3]
      %v350 = vperm.slane %v348, 0
      %v351 = vperm.slane %v348, 1
      %s354 = scalar_lea.vmem %s8, 3
      %v355 = vld [vmem:[%s354] ss:$4 sm:$0x3]
      %v357 = vperm.slane %v355, 0
      %v358 = vperm.slane %v355, 1
      %v361 = vld [vmem:[%s1] sm:$0xff]
      %v362 = vld [vmem:[%s1 + $0x8] sm:$0xff]
      %v363 = vld [vmem:[%s1 + $0x10] sm:$0xff]
      %v364 = vld [vmem:[%s1 + $0x18] sm:$0xff]
      %v365 = vld [vmem:[%s1 + $0x20] sm:$0xff]
      %v366 = vld [vmem:[%s2] sm:$0xff]
      %v367 = vld [vmem:[%s2 + $0x8] sm:$0xff]
      %v368 = vld [vmem:[%s2 + $0x10] sm:$0xff]
      %v369 = vld [vmem:[%s2 + $0x18] sm:$0xff]
      %v370 = vld [vmem:[%s2 + $0x20] sm:$0xff]
      %372 = vset.pattern.permute.xlu0 0
      %373 = vperm.xlu0 %372, %v366
      %v374 = vpop.permute.xlu0 %373
      %377 = vset.pattern.permute.xlu0 0
      %378 = vperm.xlu0 %377, %v367
      %v379 = vpop.permute.xlu0 %378
      %382 = vset.pattern.permute.xlu0 0
      %383 = vperm.xlu0 %382, %v368
      %v384 = vpop.permute.xlu0 %383
      %387 = vset.pattern.permute.xlu0 0
      %388 = vperm.xlu0 %387, %v369
      %v389 = vpop.permute.xlu0 %388
      %392 = vset.pattern.permute.xlu0 0
      %393 = vperm.xlu0 %392, %v370
      %v394 = vpop.permute.xlu0 %393
      %397 = vst [vmem:[#allocation1] ss:$2 sm:$0xff] %v333
      %v398 = vld.sshfl [vmem:[#allocation1] sm:$0xff pattern:$0x75316420]
      %v399 = vld.sshfl [vmem:[#allocation1 + $0x8] sm:$0xff pattern:$0x75316420]
      %vm400 = vcmask 31744
      %v402 = vsel %vm400, %v361, 0
      %v405 = vsel %vm400, %v362, 0
      %v408 = vsel %vm400, %v363, 0
      %v411 = vsel %vm400, %v364, 0
      %v414 = vsel %vm400, %v365, 0
      %vm416 = vcmask 1043456
      %v417 = vsel %vm416, %v398, 0
      %v419 = vsel %vm416, %v399, 0
      %421 = vmatpush.msra.mxu0 0.0
      %422 = vmatpush.msra.mxu0 0.0
      %423 = vmatpush.msra.mxu0 0.0
      %424 = vmatpush.msra.mxu0 0.0
      %425 = vmatpush.msra.mxu0 0.0
      %426 = vmatpush.msra.mxu0 0.0
      %427 = vmatpush.msra.mxu0 0.0
      %428 = vmatpush.msra.mxu0 0.0
      %429 = vmatpush.msra.mxu0 0.0
      %430 = vmatpush.msra.mxu0 0.0
      %431 = vmatpush.msra.mxu0 0.0
      %432 = vmatpush.msra.mxu0 0.0
      %433 = vmatpush.msra.mxu0 0.0
      %434 = vmatpush.msra.mxu0 0.0
      %435 = vmatpush.msra.mxu0 0.0
      %436 = vmatpush.msra.mxu0 %v417
      %437 = vmatmul.f32.gmra.mxu0 %v402
      %v438 = vpop.f32.mrf.mxu0
      %v439 = vadd.f32 %v374, %v438
      %440 = vmatmul.f32.gmra.mxu0 %v405
      %v441 = vpop.f32.mrf.mxu0
      %v442 = vadd.f32 %v379, %v441
      %443 = vmatmul.f32.gmra.mxu0 %v408
      %v444 = vpop.f32.mrf.mxu0
      %v445 = vadd.f32 %v384, %v444
      %446 = vmatmul.f32.gmra.mxu0 %v411
      %v447 = vpop.f32.mrf.mxu0
      %v448 = vadd.f32 %v389, %v447
      %449 = vmatmul.f32.gmra.mxu0 %v414
      %v450 = vpop.f32.mrf.mxu0
      %v451 = vadd.f32 %v394, %v450
      %452 = vdwg.mxu0
      %453 = vmatpush.msra.mxu0 0.0
      %454 = vmatpush.msra.mxu0 0.0
      %455 = vmatpush.msra.mxu0 0.0
      %456 = vmatpush.msra.mxu0 0.0
      %457 = vmatpush.msra.mxu0 0.0
      %458 = vmatpush.msra.mxu0 0.0
      %459 = vmatpush.msra.mxu0 0.0
      %460 = vmatpush.msra.mxu0 0.0
      %461 = vmatpush.msra.mxu0 0.0
      %462 = vmatpush.msra.mxu0 0.0
      %463 = vmatpush.msra.mxu0 0.0
      %464 = vmatpush.msra.mxu0 0.0
      %465 = vmatpush.msra.mxu0 0.0
      %466 = vmatpush.msra.mxu0 0.0
      %467 = vmatpush.msra.mxu0 0.0
      %468 = vmatpush.msra.mxu0 %v419
      %469 = vmatmul.f32.gmra.mxu0 %v402
      %v470 = vpop.f32.mrf.mxu0
      %v471 = vadd.f32 %v374, %v470
      %472 = vmatmul.f32.gmra.mxu0 %v405
      %v473 = vpop.f32.mrf.mxu0
      %v474 = vadd.f32 %v379, %v473
      %475 = vmatmul.f32.gmra.mxu0 %v408
      %v476 = vpop.f32.mrf.mxu0
      %v477 = vadd.f32 %v384, %v476
      %478 = vmatmul.f32.gmra.mxu0 %v411
      %v479 = vpop.f32.mrf.mxu0
      %v480 = vadd.f32 %v389, %v479
      %481 = vmatmul.f32.gmra.mxu0 %v414
      %v482 = vpop.f32.mrf.mxu0
      %v483 = vadd.f32 %v394, %v482
      %484 = vdwg.mxu0
      %v485 = vld [vmem:[%s4] sm:$0xff]
      %486 = vrot.lane.b32.xlu0 %v439, 1
      %v487 = vpop.permute.xlu0 %486
      %488 = vrot.lane.b32.xlu0 %v471, 1
      %v489 = vpop.permute.xlu0 %488
      %v490 = vlaneseq
      %v491 = vand.u32 %v490, 127
      %vm492 = vcmp.lt.s32.totalorder %v491, 1
      %v493 = vsel %vm492, %v487, %v489
      %v494 = vsel %vm492, %v489, %v487
      %v495 = vmul.f32 %v494, %v336
      %v496 = vmul.f32 %v493, %v337
      %497 = vrot.lane.b32.xlu0 %v439, 127
      %v498 = vpop.permute.xlu0 %497
      %499 = vrot.lane.b32.xlu0 %v471, 127
      %v500 = vpop.permute.xlu0 %499
      %vm501 = vcmp.lt.s32.totalorder %v491, 127
      %v502 = vsel %vm501, %v498, %v500
      %v503 = vsel %vm501, %v500, %v498
      %v504 = vmul.f32 %v502, %v343
      %v505 = vmul.f32 %v503, %v344
      %v506 = vld [vmem:[%s5] sm:$0xff]
      %508 = vset.pattern.permute.xlu0 0
      %509 = vperm.xlu0 %508, %v506
      %v510 = vpop.permute.xlu0 %509
      %vm512 = vcmask 195584
      %v514 = vsel %vm512, %v485, 0
      %516 = vmatpush.msra.mxu0 0.0
      %517 = vmatpush.msra.mxu0 0.0
      %518 = vmatpush.msra.mxu0 0.0
      %519 = vmatpush.msra.mxu0 0.0
      %520 = vmatpush.msra.mxu0 0.0
      %521 = vmatpush.msra.mxu0 0.0
      %522 = vmatpush.msra.mxu0 0.0
      %523 = vmatpush.msra.mxu0 0.0
      %524 = vmatpush.msra.mxu0 0.0
      %525 = vmatpush.msra.mxu0 0.0
      %526 = vmatpush.msra.mxu0 0.0
      %527 = vmatpush.msra.mxu0 0.0
      %528 = vmatpush.msra.mxu0 0.0
      %529 = vmatpush.msra.mxu0 %v504
      %530 = vmatpush.msra.mxu0 %v439
      %531 = vmatpush.msra.mxu0 %v495
      %532 = vmatmul.f32.gmra.mxu0 %v514
      %v533 = vpop.f32.mrf.mxu0
      %v534 = vadd.f32 %v510, %v533
      %535 = vdwg.mxu0
      %536 = vmatpush.msra.mxu0 0.0
      %537 = vmatpush.msra.mxu0 0.0
      %538 = vmatpush.msra.mxu0 0.0
      %539 = vmatpush.msra.mxu0 0.0
      %540 = vmatpush.msra.mxu0 0.0
      %541 = vmatpush.msra.mxu0 0.0
      %542 = vmatpush.msra.mxu0 0.0
      %543 = vmatpush.msra.mxu0 0.0
      %544 = vmatpush.msra.mxu0 0.0
      %545 = vmatpush.msra.mxu0 0.0
      %546 = vmatpush.msra.mxu0 0.0
      %547 = vmatpush.msra.mxu0 0.0
      %548 = vmatpush.msra.mxu0 0.0
      %549 = vmatpush.msra.mxu0 %v505
      %550 = vmatpush.msra.mxu0 %v471
      %551 = vmatpush.msra.mxu0 %v496
      %552 = vmatmul.f32.gmra.mxu0 %v514
      %v553 = vpop.f32.mrf.mxu0
      %v554 = vadd.f32 %v510, %v553
      %555 = vdwg.mxu0
      %v556 = vld [vmem:[%s6] sm:$0xff]
      %557 = vrot.lane.b32.xlu0 %v534, 16
      %v558 = vpop.permute.xlu0 %557
      %559 = vrot.lane.b32.xlu0 %v554, 16
      %v560 = vpop.permute.xlu0 %559
      %vm561 = vcmp.lt.s32.totalorder %v491, 16
      %v562 = vsel %vm561, %v558, %v560
      %v563 = vsel %vm561, %v560, %v558
      %v564 = vmul.f32 %v563, %v350
      %v565 = vmul.f32 %v562, %v351
      %566 = vrot.lane.b32.xlu0 %v534, 112
      %v567 = vpop.permute.xlu0 %566
      %568 = vrot.lane.b32.xlu0 %v554, 112
      %v569 = vpop.permute.xlu0 %568
      %vm570 = vcmp.lt.s32.totalorder %v491, 112
      %v571 = vsel %vm570, %v567, %v569
      %v572 = vsel %vm570, %v569, %v567
      %v573 = vmul.f32 %v571, %v357
      %v574 = vmul.f32 %v572, %v358
      %v575 = vld [vmem:[%s7] sm:$0xff]
      %577 = vset.pattern.permute.xlu0 0
      %578 = vperm.xlu0 %577, %v575
      %v579 = vpop.permute.xlu0 %578
      %v582 = vsel %vm512, %v556, 0
      %584 = vmatpush.msra.mxu0 0.0
      %585 = vmatpush.msra.mxu0 0.0
      %586 = vmatpush.msra.mxu0 0.0
      %587 = vmatpush.msra.mxu0 0.0
      %588 = vmatpush.msra.mxu0 0.0
      %589 = vmatpush.msra.mxu0 0.0
      %590 = vmatpush.msra.mxu0 0.0
      %591 = vmatpush.msra.mxu0 0.0
      %592 = vmatpush.msra.mxu0 0.0
      %593 = vmatpush.msra.mxu0 0.0
      %594 = vmatpush.msra.mxu0 0.0
      %595 = vmatpush.msra.mxu0 0.0
      %596 = vmatpush.msra.mxu0 0.0
      %597 = vmatpush.msra.mxu0 %v573
      %598 = vmatpush.msra.mxu0 %v534
      %599 = vmatpush.msra.mxu0 %v564
      %600 = vmatmul.f32.gmra.mxu0 %v582
      %v601 = vpop.f32.mrf.mxu0
      %v602 = vadd.f32 %v579, %v601
      %603 = vdwg.mxu0
      %604 = vmatpush.msra.mxu0 0.0
      %605 = vmatpush.msra.mxu0 0.0
      %606 = vmatpush.msra.mxu0 0.0
      %607 = vmatpush.msra.mxu0 0.0
      %608 = vmatpush.msra.mxu0 0.0
      %609 = vmatpush.msra.mxu0 0.0
      %610 = vmatpush.msra.mxu0 0.0
      %611 = vmatpush.msra.mxu0 0.0
      %612 = vmatpush.msra.mxu0 0.0
      %613 = vmatpush.msra.mxu0 0.0
      %614 = vmatpush.msra.mxu0 0.0
      %615 = vmatpush.msra.mxu0 0.0
      %616 = vmatpush.msra.mxu0 0.0
      %617 = vmatpush.msra.mxu0 %v574
      %618 = vmatpush.msra.mxu0 %v554
      %619 = vmatpush.msra.mxu0 %v565
      %620 = vmatmul.f32.gmra.mxu0 %v582
      %v621 = vpop.f32.mrf.mxu0
      %v622 = vadd.f32 %v579, %v621
      %623 = vdwg.mxu0
      %v624 = vadd.f32 %v602, 0.0
      %v625 = vadd.f32 %v622, 0.0
      %s626 = scalar_lea.vmem %s4, 8
      %v627 = vld [vmem:[%s626] sm:$0xff]
      %628 = vrot.lane.b32.xlu0 %v442, 1
      %v629 = vpop.permute.xlu0 %628
      %630 = vrot.lane.b32.xlu0 %v474, 1
      %v631 = vpop.permute.xlu0 %630
      %v632 = vsel %vm492, %v629, %v631
      %v633 = vsel %vm492, %v631, %v629
      %v634 = vmul.f32 %v633, %v336
      %v635 = vmul.f32 %v632, %v337
      %636 = vrot.lane.b32.xlu0 %v442, 127
      %v637 = vpop.permute.xlu0 %636
      %638 = vrot.lane.b32.xlu0 %v474, 127
      %v639 = vpop.permute.xlu0 %638
      %v640 = vsel %vm501, %v637, %v639
      %v641 = vsel %vm501, %v639, %v637
      %v642 = vmul.f32 %v640, %v343
      %v643 = vmul.f32 %v641, %v344
      %s644 = scalar_lea.vmem %s5, 8
      %v645 = vld [vmem:[%s644] sm:$0xff]
      %647 = vset.pattern.permute.xlu0 0
      %648 = vperm.xlu0 %647, %v645
      %v649 = vpop.permute.xlu0 %648
      %v652 = vsel %vm512, %v627, 0
      %654 = vmatpush.msra.mxu0 0.0
      %655 = vmatpush.msra.mxu0 0.0
      %656 = vmatpush.msra.mxu0 0.0
      %657 = vmatpush.msra.mxu0 0.0
      %658 = vmatpush.msra.mxu0 0.0
      %659 = vmatpush.msra.mxu0 0.0
      %660 = vmatpush.msra.mxu0 0.0
      %661 = vmatpush.msra.mxu0 0.0
      %662 = vmatpush.msra.mxu0 0.0
      %663 = vmatpush.msra.mxu0 0.0
      %664 = vmatpush.msra.mxu0 0.0
      %665 = vmatpush.msra.mxu0 0.0
      %666 = vmatpush.msra.mxu0 0.0
      %667 = vmatpush.msra.mxu0 %v642
      %668 = vmatpush.msra.mxu0 %v442
      %669 = vmatpush.msra.mxu0 %v634
      %670 = vmatmul.f32.gmra.mxu0 %v652
      %v671 = vpop.f32.mrf.mxu0
      %v672 = vadd.f32 %v649, %v671
      %673 = vdwg.mxu0
      %674 = vmatpush.msra.mxu0 0.0
      %675 = vmatpush.msra.mxu0 0.0
      %676 = vmatpush.msra.mxu0 0.0
      %677 = vmatpush.msra.mxu0 0.0
      %678 = vmatpush.msra.mxu0 0.0
      %679 = vmatpush.msra.mxu0 0.0
      %680 = vmatpush.msra.mxu0 0.0
      %681 = vmatpush.msra.mxu0 0.0
      %682 = vmatpush.msra.mxu0 0.0
      %683 = vmatpush.msra.mxu0 0.0
      %684 = vmatpush.msra.mxu0 0.0
      %685 = vmatpush.msra.mxu0 0.0
      %686 = vmatpush.msra.mxu0 0.0
      %687 = vmatpush.msra.mxu0 %v643
      %688 = vmatpush.msra.mxu0 %v474
      %689 = vmatpush.msra.mxu0 %v635
      %690 = vmatmul.f32.gmra.mxu0 %v652
      %v691 = vpop.f32.mrf.mxu0
      %v692 = vadd.f32 %v649, %v691
      %693 = vdwg.mxu0
      %s694 = scalar_lea.vmem %s6, 8
      %v695 = vld [vmem:[%s694] sm:$0xff]
      %696 = vrot.lane.b32.xlu0 %v672, 16
      %v697 = vpop.permute.xlu0 %696
      %698 = vrot.lane.b32.xlu0 %v692, 16
      %v699 = vpop.permute.xlu0 %698
      %v700 = vsel %vm561, %v697, %v699
      %v701 = vsel %vm561, %v699, %v697
      %v702 = vmul.f32 %v701, %v350
      %v703 = vmul.f32 %v700, %v351
      %704 = vrot.lane.b32.xlu0 %v672, 112
      %v705 = vpop.permute.xlu0 %704
      %706 = vrot.lane.b32.xlu0 %v692, 112
      %v707 = vpop.permute.xlu0 %706
      %v708 = vsel %vm570, %v705, %v707
      %v709 = vsel %vm570, %v707, %v705
      %v710 = vmul.f32 %v708, %v357
      %v711 = vmul.f32 %v709, %v358
      %s712 = scalar_lea.vmem %s7, 8
      %v713 = vld [vmem:[%s712] sm:$0xff]
      %715 = vset.pattern.permute.xlu0 0
      %716 = vperm.xlu0 %715, %v713
      %v717 = vpop.permute.xlu0 %716
      %v720 = vsel %vm512, %v695, 0
      %722 = vmatpush.msra.mxu0 0.0
      %723 = vmatpush.msra.mxu0 0.0
      %724 = vmatpush.msra.mxu0 0.0
      %725 = vmatpush.msra.mxu0 0.0
      %726 = vmatpush.msra.mxu0 0.0
      %727 = vmatpush.msra.mxu0 0.0
      %728 = vmatpush.msra.mxu0 0.0
      %729 = vmatpush.msra.mxu0 0.0
      %730 = vmatpush.msra.mxu0 0.0
      %731 = vmatpush.msra.mxu0 0.0
      %732 = vmatpush.msra.mxu0 0.0
      %733 = vmatpush.msra.mxu0 0.0
      %734 = vmatpush.msra.mxu0 0.0
      %735 = vmatpush.msra.mxu0 %v710
      %736 = vmatpush.msra.mxu0 %v672
      %737 = vmatpush.msra.mxu0 %v702
      %738 = vmatmul.f32.gmra.mxu0 %v720
      %v739 = vpop.f32.mrf.mxu0
      %v740 = vadd.f32 %v717, %v739
      %741 = vdwg.mxu0
      %742 = vmatpush.msra.mxu0 0.0
      %743 = vmatpush.msra.mxu0 0.0
      %744 = vmatpush.msra.mxu0 0.0
      %745 = vmatpush.msra.mxu0 0.0
      %746 = vmatpush.msra.mxu0 0.0
      %747 = vmatpush.msra.mxu0 0.0
      %748 = vmatpush.msra.mxu0 0.0
      %749 = vmatpush.msra.mxu0 0.0
      %750 = vmatpush.msra.mxu0 0.0
      %751 = vmatpush.msra.mxu0 0.0
      %752 = vmatpush.msra.mxu0 0.0
      %753 = vmatpush.msra.mxu0 0.0
      %754 = vmatpush.msra.mxu0 0.0
      %755 = vmatpush.msra.mxu0 %v711
      %756 = vmatpush.msra.mxu0 %v692
      %757 = vmatpush.msra.mxu0 %v703
      %758 = vmatmul.f32.gmra.mxu0 %v720
      %v759 = vpop.f32.mrf.mxu0
      %v760 = vadd.f32 %v717, %v759
      %761 = vdwg.mxu0
      %762 = vrot.lane.b32.xlu0 %v740, 1
      %v763 = vpop.permute.xlu0 %762
      %764 = vrot.lane.b32.xlu0 %v760, 1
      %v765 = vpop.permute.xlu0 %764
      %v766 = vsel %vm492, %v763, %v765
      %v767 = vsel %vm492, %v765, %v763
      %v768 = vmul.f32 %v767, %v336
      %v769 = vmul.f32 %v766, %v337
      %770 = vrot.lane.b32.xlu0 %v740, 127
      %v771 = vpop.permute.xlu0 %770
      %772 = vrot.lane.b32.xlu0 %v760, 127
      %v773 = vpop.permute.xlu0 %772
      %v774 = vsel %vm501, %v771, %v773
      %v775 = vsel %vm501, %v773, %v771
      %v776 = vmul.f32 %v774, %v343
      %v777 = vmul.f32 %v775, %v344
      %778 = vmatpush.msra.mxu0 0.0
      %779 = vmatpush.msra.mxu0 0.0
      %780 = vmatpush.msra.mxu0 0.0
      %781 = vmatpush.msra.mxu0 0.0
      %782 = vmatpush.msra.mxu0 0.0
      %783 = vmatpush.msra.mxu0 0.0
      %784 = vmatpush.msra.mxu0 0.0
      %785 = vmatpush.msra.mxu0 0.0
      %786 = vmatpush.msra.mxu0 0.0
      %787 = vmatpush.msra.mxu0 0.0
      %788 = vmatpush.msra.mxu0 0.0
      %789 = vmatpush.msra.mxu0 0.0
      %790 = vmatpush.msra.mxu0 0.0
      %791 = vmatpush.msra.mxu0 %v776
      %792 = vmatpush.msra.mxu0 %v740
      %793 = vmatpush.msra.mxu0 %v768
      %794 = vmatmul.f32.gmra.mxu0 %v652
      %v795 = vpop.f32.mrf.mxu0
      %v796 = vadd.f32 %v649, %v795
      %797 = vdwg.mxu0
      %798 = vmatpush.msra.mxu0 0.0
      %799 = vmatpush.msra.mxu0 0.0
      %800 = vmatpush.msra.mxu0 0.0
      %801 = vmatpush.msra.mxu0 0.0
      %802 = vmatpush.msra.mxu0 0.0
      %803 = vmatpush.msra.mxu0 0.0
      %804 = vmatpush.msra.mxu0 0.0
      %805 = vmatpush.msra.mxu0 0.0
      %806 = vmatpush.msra.mxu0 0.0
      %807 = vmatpush.msra.mxu0 0.0
      %808 = vmatpush.msra.mxu0 0.0
      %809 = vmatpush.msra.mxu0 0.0
      %810 = vmatpush.msra.mxu0 0.0
      %811 = vmatpush.msra.mxu0 %v777
      %812 = vmatpush.msra.mxu0 %v760
      %813 = vmatpush.msra.mxu0 %v769
      %814 = vmatmul.f32.gmra.mxu0 %v652
      %v815 = vpop.f32.mrf.mxu0
      %v816 = vadd.f32 %v649, %v815
      %817 = vdwg.mxu0
      %818 = vrot.lane.b32.xlu0 %v796, 16
      %v819 = vpop.permute.xlu0 %818
      %820 = vrot.lane.b32.xlu0 %v816, 16
      %v821 = vpop.permute.xlu0 %820
      %v822 = vsel %vm561, %v819, %v821
      %v823 = vsel %vm561, %v821, %v819
      %v824 = vmul.f32 %v823, %v350
      %v825 = vmul.f32 %v822, %v351
      %826 = vrot.lane.b32.xlu0 %v796, 112
      %v827 = vpop.permute.xlu0 %826
      %828 = vrot.lane.b32.xlu0 %v816, 112
      %v829 = vpop.permute.xlu0 %828
      %v830 = vsel %vm570, %v827, %v829
      %v831 = vsel %vm570, %v829, %v827
      %v832 = vmul.f32 %v830, %v357
      %v833 = vmul.f32 %v831, %v358
      %834 = vmatpush.msra.mxu0 0.0
      %835 = vmatpush.msra.mxu0 0.0
      %836 = vmatpush.msra.mxu0 0.0
      %837 = vmatpush.msra.mxu0 0.0
      %838 = vmatpush.msra.mxu0 0.0
      %839 = vmatpush.msra.mxu0 0.0
      %840 = vmatpush.msra.mxu0 0.0
      %841 = vmatpush.msra.mxu0 0.0
      %842 = vmatpush.msra.mxu0 0.0
      %843 = vmatpush.msra.mxu0 0.0
      %844 = vmatpush.msra.mxu0 0.0
      %845 = vmatpush.msra.mxu0 0.0
      %846 = vmatpush.msra.mxu0 0.0
      %847 = vmatpush.msra.mxu0 %v832
      %848 = vmatpush.msra.mxu0 %v796
      %849 = vmatpush.msra.mxu0 %v824
      %850 = vmatmul.f32.gmra.mxu0 %v720
      %v851 = vpop.f32.mrf.mxu0
      %v852 = vadd.f32 %v717, %v851
      %853 = vdwg.mxu0
      %854 = vmatpush.msra.mxu0 0.0
      %855 = vmatpush.msra.mxu0 0.0
      %856 = vmatpush.msra.mxu0 0.0
      %857 = vmatpush.msra.mxu0 0.0
      %858 = vmatpush.msra.mxu0 0.0
      %859 = vmatpush.msra.mxu0 0.0
      %860 = vmatpush.msra.mxu0 0.0
      %861 = vmatpush.msra.mxu0 0.0
      %862 = vmatpush.msra.mxu0 0.0
      %863 = vmatpush.msra.mxu0 0.0
      %864 = vmatpush.msra.mxu0 0.0
      %865 = vmatpush.msra.mxu0 0.0
      %866 = vmatpush.msra.mxu0 0.0
      %867 = vmatpush.msra.mxu0 %v833
      %868 = vmatpush.msra.mxu0 %v816
      %869 = vmatpush.msra.mxu0 %v825
      %870 = vmatmul.f32.gmra.mxu0 %v720
      %v871 = vpop.f32.mrf.mxu0
      %v872 = vadd.f32 %v717, %v871
      %873 = vdwg.mxu0
      %v874 = vadd.f32 %v624, %v852
      %v875 = vadd.f32 %v625, %v872
      %s876 = scalar_lea.vmem %s4, 16
      %v877 = vld [vmem:[%s876] sm:$0xff]
      %878 = vrot.lane.b32.xlu0 %v445, 1
      %v879 = vpop.permute.xlu0 %878
      %880 = vrot.lane.b32.xlu0 %v477, 1
      %v881 = vpop.permute.xlu0 %880
      %v882 = vsel %vm492, %v879, %v881
      %v883 = vsel %vm492, %v881, %v879
      %v884 = vmul.f32 %v883, %v336
      %v885 = vmul.f32 %v882, %v337
      %886 = vrot.lane.b32.xlu0 %v445, 127
      %v887 = vpop.permute.xlu0 %886
      %888 = vrot.lane.b32.xlu0 %v477, 127
      %v889 = vpop.permute.xlu0 %888
      %v890 = vsel %vm501, %v887, %v889
      %v891 = vsel %vm501, %v889, %v887
      %v892 = vmul.f32 %v890, %v343
      %v893 = vmul.f32 %v891, %v344
      %s894 = scalar_lea.vmem %s5, 16
      %v895 = vld [vmem:[%s894] sm:$0xff]
      %897 = vset.pattern.permute.xlu0 0
      %898 = vperm.xlu0 %897, %v895
      %v899 = vpop.permute.xlu0 %898
      %v902 = vsel %vm512, %v877, 0
      %904 = vmatpush.msra.mxu0 0.0
      %905 = vmatpush.msra.mxu0 0.0
      %906 = vmatpush.msra.mxu0 0.0
      %907 = vmatpush.msra.mxu0 0.0
      %908 = vmatpush.msra.mxu0 0.0
      %909 = vmatpush.msra.mxu0 0.0
      %910 = vmatpush.msra.mxu0 0.0
      %911 = vmatpush.msra.mxu0 0.0
      %912 = vmatpush.msra.mxu0 0.0
      %913 = vmatpush.msra.mxu0 0.0
      %914 = vmatpush.msra.mxu0 0.0
      %915 = vmatpush.msra.mxu0 0.0
      %916 = vmatpush.msra.mxu0 0.0
      %917 = vmatpush.msra.mxu0 %v892
      %918 = vmatpush.msra.mxu0 %v445
      %919 = vmatpush.msra.mxu0 %v884
      %920 = vmatmul.f32.gmra.mxu0 %v902
      %v921 = vpop.f32.mrf.mxu0
      %v922 = vadd.f32 %v899, %v921
      %923 = vdwg.mxu0
      %924 = vmatpush.msra.mxu0 0.0
      %925 = vmatpush.msra.mxu0 0.0
      %926 = vmatpush.msra.mxu0 0.0
      %927 = vmatpush.msra.mxu0 0.0
      %928 = vmatpush.msra.mxu0 0.0
      %929 = vmatpush.msra.mxu0 0.0
      %930 = vmatpush.msra.mxu0 0.0
      %931 = vmatpush.msra.mxu0 0.0
      %932 = vmatpush.msra.mxu0 0.0
      %933 = vmatpush.msra.mxu0 0.0
      %934 = vmatpush.msra.mxu0 0.0
      %935 = vmatpush.msra.mxu0 0.0
      %936 = vmatpush.msra.mxu0 0.0
      %937 = vmatpush.msra.mxu0 %v893
      %938 = vmatpush.msra.mxu0 %v477
      %939 = vmatpush.msra.mxu0 %v885
      %940 = vmatmul.f32.gmra.mxu0 %v902
      %v941 = vpop.f32.mrf.mxu0
      %v942 = vadd.f32 %v899, %v941
      %943 = vdwg.mxu0
      %s944 = scalar_lea.vmem %s6, 16
      %v945 = vld [vmem:[%s944] sm:$0xff]
      %946 = vrot.lane.b32.xlu0 %v922, 16
      %v947 = vpop.permute.xlu0 %946
      %948 = vrot.lane.b32.xlu0 %v942, 16
      %v949 = vpop.permute.xlu0 %948
      %v950 = vsel %vm561, %v947, %v949
      %v951 = vsel %vm561, %v949, %v947
      %v952 = vmul.f32 %v951, %v350
      %v953 = vmul.f32 %v950, %v351
      %954 = vrot.lane.b32.xlu0 %v922, 112
      %v955 = vpop.permute.xlu0 %954
      %956 = vrot.lane.b32.xlu0 %v942, 112
      %v957 = vpop.permute.xlu0 %956
      %v958 = vsel %vm570, %v955, %v957
      %v959 = vsel %vm570, %v957, %v955
      %v960 = vmul.f32 %v958, %v357
      %v961 = vmul.f32 %v959, %v358
      %s962 = scalar_lea.vmem %s7, 16
      %v963 = vld [vmem:[%s962] sm:$0xff]
      %965 = vset.pattern.permute.xlu0 0
      %966 = vperm.xlu0 %965, %v963
      %v967 = vpop.permute.xlu0 %966
      %v970 = vsel %vm512, %v945, 0
      %972 = vmatpush.msra.mxu0 0.0
      %973 = vmatpush.msra.mxu0 0.0
      %974 = vmatpush.msra.mxu0 0.0
      %975 = vmatpush.msra.mxu0 0.0
      %976 = vmatpush.msra.mxu0 0.0
      %977 = vmatpush.msra.mxu0 0.0
      %978 = vmatpush.msra.mxu0 0.0
      %979 = vmatpush.msra.mxu0 0.0
      %980 = vmatpush.msra.mxu0 0.0
      %981 = vmatpush.msra.mxu0 0.0
      %982 = vmatpush.msra.mxu0 0.0
      %983 = vmatpush.msra.mxu0 0.0
      %984 = vmatpush.msra.mxu0 0.0
      %985 = vmatpush.msra.mxu0 %v960
      %986 = vmatpush.msra.mxu0 %v922
      %987 = vmatpush.msra.mxu0 %v952
      %988 = vmatmul.f32.gmra.mxu0 %v970
      %v989 = vpop.f32.mrf.mxu0
      %v990 = vadd.f32 %v967, %v989
      %991 = vdwg.mxu0
      %992 = vmatpush.msra.mxu0 0.0
      %993 = vmatpush.msra.mxu0 0.0
      %994 = vmatpush.msra.mxu0 0.0
      %995 = vmatpush.msra.mxu0 0.0
      %996 = vmatpush.msra.mxu0 0.0
      %997 = vmatpush.msra.mxu0 0.0
      %998 = vmatpush.msra.mxu0 0.0
      %999 = vmatpush.msra.mxu0 0.0
      %1000 = vmatpush.msra.mxu0 0.0
      %1001 = vmatpush.msra.mxu0 0.0
      %1002 = vmatpush.msra.mxu0 0.0
      %1003 = vmatpush.msra.mxu0 0.0
      %1004 = vmatpush.msra.mxu0 0.0
      %1005 = vmatpush.msra.mxu0 %v961
      %1006 = vmatpush.msra.mxu0 %v942
      %1007 = vmatpush.msra.mxu0 %v953
      %1008 = vmatmul.f32.gmra.mxu0 %v970
      %v1009 = vpop.f32.mrf.mxu0
      %v1010 = vadd.f32 %v967, %v1009
      %1011 = vdwg.mxu0
      %1012 = vrot.lane.b32.xlu0 %v990, 1
      %v1013 = vpop.permute.xlu0 %1012
      %1014 = vrot.lane.b32.xlu0 %v1010, 1
      %v1015 = vpop.permute.xlu0 %1014
      %v1016 = vsel %vm492, %v1013, %v1015
      %v1017 = vsel %vm492, %v1015, %v1013
      %v1018 = vmul.f32 %v1017, %v336
      %v1019 = vmul.f32 %v1016, %v337
      %1020 = vrot.lane.b32.xlu0 %v990, 127
      %v1021 = vpop.permute.xlu0 %1020
      %1022 = vrot.lane.b32.xlu0 %v1010, 127
      %v1023 = vpop.permute.xlu0 %1022
      %v1024 = vsel %vm501, %v1021, %v1023
      %v1025 = vsel %vm501, %v1023, %v1021
      %v1026 = vmul.f32 %v1024, %v343
      %v1027 = vmul.f32 %v1025, %v344
      %1028 = vmatpush.msra.mxu0 0.0
      %1029 = vmatpush.msra.mxu0 0.0
      %1030 = vmatpush.msra.mxu0 0.0
      %1031 = vmatpush.msra.mxu0 0.0
      %1032 = vmatpush.msra.mxu0 0.0
      %1033 = vmatpush.msra.mxu0 0.0
      %1034 = vmatpush.msra.mxu0 0.0
      %1035 = vmatpush.msra.mxu0 0.0
      %1036 = vmatpush.msra.mxu0 0.0
      %1037 = vmatpush.msra.mxu0 0.0
      %1038 = vmatpush.msra.mxu0 0.0
      %1039 = vmatpush.msra.mxu0 0.0
      %1040 = vmatpush.msra.mxu0 0.0
      %1041 = vmatpush.msra.mxu0 %v1026
      %1042 = vmatpush.msra.mxu0 %v990
      %1043 = vmatpush.msra.mxu0 %v1018
      %1044 = vmatmul.f32.gmra.mxu0 %v902
      %v1045 = vpop.f32.mrf.mxu0
      %v1046 = vadd.f32 %v899, %v1045
      %1047 = vdwg.mxu0
      %1048 = vmatpush.msra.mxu0 0.0
      %1049 = vmatpush.msra.mxu0 0.0
      %1050 = vmatpush.msra.mxu0 0.0
      %1051 = vmatpush.msra.mxu0 0.0
      %1052 = vmatpush.msra.mxu0 0.0
      %1053 = vmatpush.msra.mxu0 0.0
      %1054 = vmatpush.msra.mxu0 0.0
      %1055 = vmatpush.msra.mxu0 0.0
      %1056 = vmatpush.msra.mxu0 0.0
      %1057 = vmatpush.msra.mxu0 0.0
      %1058 = vmatpush.msra.mxu0 0.0
      %1059 = vmatpush.msra.mxu0 0.0
      %1060 = vmatpush.msra.mxu0 0.0
      %1061 = vmatpush.msra.mxu0 %v1027
      %1062 = vmatpush.msra.mxu0 %v1010
      %1063 = vmatpush.msra.mxu0 %v1019
      %1064 = vmatmul.f32.gmra.mxu0 %v902
      %v1065 = vpop.f32.mrf.mxu0
      %v1066 = vadd.f32 %v899, %v1065
      %1067 = vdwg.mxu0
      %1068 = vrot.lane.b32.xlu0 %v1046, 16
      %v1069 = vpop.permute.xlu0 %1068
      %1070 = vrot.lane.b32.xlu0 %v1066, 16
      %v1071 = vpop.permute.xlu0 %1070
      %v1072 = vsel %vm561, %v1069, %v1071
      %v1073 = vsel %vm561, %v1071, %v1069
      %v1074 = vmul.f32 %v1073, %v350
      %v1075 = vmul.f32 %v1072, %v351
      %1076 = vrot.lane.b32.xlu0 %v1046, 112
      %v1077 = vpop.permute.xlu0 %1076
      %1078 = vrot.lane.b32.xlu0 %v1066, 112
      %v1079 = vpop.permute.xlu0 %1078
      %v1080 = vsel %vm570, %v1077, %v1079
      %v1081 = vsel %vm570, %v1079, %v1077
      %v1082 = vmul.f32 %v1080, %v357
      %v1083 = vmul.f32 %v1081, %v358
      %1084 = vmatpush.msra.mxu0 0.0
      %1085 = vmatpush.msra.mxu0 0.0
      %1086 = vmatpush.msra.mxu0 0.0
      %1087 = vmatpush.msra.mxu0 0.0
      %1088 = vmatpush.msra.mxu0 0.0
      %1089 = vmatpush.msra.mxu0 0.0
      %1090 = vmatpush.msra.mxu0 0.0
      %1091 = vmatpush.msra.mxu0 0.0
      %1092 = vmatpush.msra.mxu0 0.0
      %1093 = vmatpush.msra.mxu0 0.0
      %1094 = vmatpush.msra.mxu0 0.0
      %1095 = vmatpush.msra.mxu0 0.0
      %1096 = vmatpush.msra.mxu0 0.0
      %1097 = vmatpush.msra.mxu0 %v1082
      %1098 = vmatpush.msra.mxu0 %v1046
      %1099 = vmatpush.msra.mxu0 %v1074
      %1100 = vmatmul.f32.gmra.mxu0 %v970
      %v1101 = vpop.f32.mrf.mxu0
      %v1102 = vadd.f32 %v967, %v1101
      %1103 = vdwg.mxu0
      %1104 = vmatpush.msra.mxu0 0.0
      %1105 = vmatpush.msra.mxu0 0.0
      %1106 = vmatpush.msra.mxu0 0.0
      %1107 = vmatpush.msra.mxu0 0.0
      %1108 = vmatpush.msra.mxu0 0.0
      %1109 = vmatpush.msra.mxu0 0.0
      %1110 = vmatpush.msra.mxu0 0.0
      %1111 = vmatpush.msra.mxu0 0.0
      %1112 = vmatpush.msra.mxu0 0.0
      %1113 = vmatpush.msra.mxu0 0.0
      %1114 = vmatpush.msra.mxu0 0.0
      %1115 = vmatpush.msra.mxu0 0.0
      %1116 = vmatpush.msra.mxu0 0.0
      %1117 = vmatpush.msra.mxu0 %v1083
      %1118 = vmatpush.msra.mxu0 %v1066
      %1119 = vmatpush.msra.mxu0 %v1075
      %1120 = vmatmul.f32.gmra.mxu0 %v970
      %v1121 = vpop.f32.mrf.mxu0
      %v1122 = vadd.f32 %v967, %v1121
      %1123 = vdwg.mxu0
      %1124 = vrot.lane.b32.xlu0 %v1102, 1
      %v1125 = vpop.permute.xlu0 %1124
      %1126 = vrot.lane.b32.xlu0 %v1122, 1
      %v1127 = vpop.permute.xlu0 %1126
      %v1128 = vsel %vm492, %v1125, %v1127
      %v1129 = vsel %vm492, %v1127, %v1125
      %v1130 = vmul.f32 %v1129, %v336
      %v1131 = vmul.f32 %v1128, %v337
      %1132 = vrot.lane.b32.xlu0 %v1102, 127
      %v1133 = vpop.permute.xlu0 %1132
      %1134 = vrot.lane.b32.xlu0 %v1122, 127
      %v1135 = vpop.permute.xlu0 %1134
      %v1136 = vsel %vm501, %v1133, %v1135
      %v1137 = vsel %vm501, %v1135, %v1133
      %v1138 = vmul.f32 %v1136, %v343
      %v1139 = vmul.f32 %v1137, %v344
      %1140 = vmatpush.msra.mxu0 0.0
      %1141 = vmatpush.msra.mxu0 0.0
      %1142 = vmatpush.msra.mxu0 0.0
      %1143 = vmatpush.msra.mxu0 0.0
      %1144 = vmatpush.msra.mxu0 0.0
      %1145 = vmatpush.msra.mxu0 0.0
      %1146 = vmatpush.msra.mxu0 0.0
      %1147 = vmatpush.msra.mxu0 0.0
      %1148 = vmatpush.msra.mxu0 0.0
      %1149 = vmatpush.msra.mxu0 0.0
      %1150 = vmatpush.msra.mxu0 0.0
      %1151 = vmatpush.msra.mxu0 0.0
      %1152 = vmatpush.msra.mxu0 0.0
      %1153 = vmatpush.msra.mxu0 %v1138
      %1154 = vmatpush.msra.mxu0 %v1102
      %1155 = vmatpush.msra.mxu0 %v1130
      %1156 = vmatmul.f32.gmra.mxu0 %v902
      %v1157 = vpop.f32.mrf.mxu0
      %v1158 = vadd.f32 %v899, %v1157
      %1159 = vdwg.mxu0
      %1160 = vmatpush.msra.mxu0 0.0
      %1161 = vmatpush.msra.mxu0 0.0
      %1162 = vmatpush.msra.mxu0 0.0
      %1163 = vmatpush.msra.mxu0 0.0
      %1164 = vmatpush.msra.mxu0 0.0
      %1165 = vmatpush.msra.mxu0 0.0
      %1166 = vmatpush.msra.mxu0 0.0
      %1167 = vmatpush.msra.mxu0 0.0
      %1168 = vmatpush.msra.mxu0 0.0
      %1169 = vmatpush.msra.mxu0 0.0
      %1170 = vmatpush.msra.mxu0 0.0
      %1171 = vmatpush.msra.mxu0 0.0
      %1172 = vmatpush.msra.mxu0 0.0
      %1173 = vmatpush.msra.mxu0 %v1139
      %1174 = vmatpush.msra.mxu0 %v1122
      %1175 = vmatpush.msra.mxu0 %v1131
      %1176 = vmatmul.f32.gmra.mxu0 %v902
      %v1177 = vpop.f32.mrf.mxu0
      %v1178 = vadd.f32 %v899, %v1177
      %1179 = vdwg.mxu0
      %1180 = vrot.lane.b32.xlu0 %v1158, 16
      %v1181 = vpop.permute.xlu0 %1180
      %1182 = vrot.lane.b32.xlu0 %v1178, 16
      %v1183 = vpop.permute.xlu0 %1182
      %v1184 = vsel %vm561, %v1181, %v1183
      %v1185 = vsel %vm561, %v1183, %v1181
      %v1186 = vmul.f32 %v1185, %v350
      %v1187 = vmul.f32 %v1184, %v351
      %1188 = vrot.lane.b32.xlu0 %v1158, 112
      %v1189 = vpop.permute.xlu0 %1188
      %1190 = vrot.lane.b32.xlu0 %v1178, 112
      %v1191 = vpop.permute.xlu0 %1190
      %v1192 = vsel %vm570, %v1189, %v1191
      %v1193 = vsel %vm570, %v1191, %v1189
      %v1194 = vmul.f32 %v1192, %v357
      %v1195 = vmul.f32 %v1193, %v358
      %1196 = vmatpush.msra.mxu0 0.0
      %1197 = vmatpush.msra.mxu0 0.0
      %1198 = vmatpush.msra.mxu0 0.0
      %1199 = vmatpush.msra.mxu0 0.0
      %1200 = vmatpush.msra.mxu0 0.0
      %1201 = vmatpush.msra.mxu0 0.0
      %1202 = vmatpush.msra.mxu0 0.0
      %1203 = vmatpush.msra.mxu0 0.0
      %1204 = vmatpush.msra.mxu0 0.0
      %1205 = vmatpush.msra.mxu0 0.0
      %1206 = vmatpush.msra.mxu0 0.0
      %1207 = vmatpush.msra.mxu0 0.0
      %1208 = vmatpush.msra.mxu0 0.0
      %1209 = vmatpush.msra.mxu0 %v1194
      %1210 = vmatpush.msra.mxu0 %v1158
      %1211 = vmatpush.msra.mxu0 %v1186
      %1212 = vmatmul.f32.gmra.mxu0 %v970
      %v1213 = vpop.f32.mrf.mxu0
      %v1214 = vadd.f32 %v967, %v1213
      %1215 = vdwg.mxu0
      %1216 = vmatpush.msra.mxu0 0.0
      %1217 = vmatpush.msra.mxu0 0.0
      %1218 = vmatpush.msra.mxu0 0.0
      %1219 = vmatpush.msra.mxu0 0.0
      %1220 = vmatpush.msra.mxu0 0.0
      %1221 = vmatpush.msra.mxu0 0.0
      %1222 = vmatpush.msra.mxu0 0.0
      %1223 = vmatpush.msra.mxu0 0.0
      %1224 = vmatpush.msra.mxu0 0.0
      %1225 = vmatpush.msra.mxu0 0.0
      %1226 = vmatpush.msra.mxu0 0.0
      %1227 = vmatpush.msra.mxu0 0.0
      %1228 = vmatpush.msra.mxu0 0.0
      %1229 = vmatpush.msra.mxu0 %v1195
      %1230 = vmatpush.msra.mxu0 %v1178
      %1231 = vmatpush.msra.mxu0 %v1187
      %1232 = vmatmul.f32.gmra.mxu0 %v970
      %v1233 = vpop.f32.mrf.mxu0
      %v1234 = vadd.f32 %v967, %v1233
      %1235 = vdwg.mxu0
      %v1236 = vadd.f32 %v874, %v1214
      %v1237 = vadd.f32 %v875, %v1234
      %v1238 = vadd.f32 %v1236, %v448
      %v1239 = vadd.f32 %v1237, %v480
      %1240 = vrot.lane.b32.xlu0 %v451, 1
      %v1241 = vpop.permute.xlu0 %1240
      %1242 = vrot.lane.b32.xlu0 %v483, 1
      %v1243 = vpop.permute.xlu0 %1242
      %v1244 = vsel %vm492, %v1241, %v1243
      %v1245 = vsel %vm492, %v1243, %v1241
      %v1246 = vmul.f32 %v1245, %v336
      %v1247 = vmul.f32 %v1244, %v337
      %v1248 = vadd.f32 %v451, %v1246
      %v1249 = vadd.f32 %v483, %v1247
      %1250 = vrot.lane.b32.xlu0 %v451, 127
      %v1251 = vpop.permute.xlu0 %1250
      %1252 = vrot.lane.b32.xlu0 %v483, 127
      %v1253 = vpop.permute.xlu0 %1252
      %v1254 = vsel %vm501, %v1251, %v1253
      %v1255 = vsel %vm501, %v1253, %v1251
      %v1256 = vmul.f32 %v1254, %v343
      %v1257 = vmul.f32 %v1255, %v344
      %v1258 = vadd.f32 %v1248, %v1256
      %v1259 = vadd.f32 %v1249, %v1257
      %1260 = vrot.lane.b32.xlu0 %v1258, 16
      %v1261 = vpop.permute.xlu0 %1260
      %1262 = vrot.lane.b32.xlu0 %v1259, 16
      %v1263 = vpop.permute.xlu0 %1262
      %v1264 = vsel %vm561, %v1261, %v1263
      %v1265 = vsel %vm561, %v1263, %v1261
      %v1266 = vmul.f32 %v1265, %v350
      %v1267 = vmul.f32 %v1264, %v351
      %v1268 = vadd.f32 %v1258, %v1266
      %v1269 = vadd.f32 %v1259, %v1267
      %1270 = vrot.lane.b32.xlu0 %v1258, 112
      %v1271 = vpop.permute.xlu0 %1270
      %1272 = vrot.lane.b32.xlu0 %v1259, 112
      %v1273 = vpop.permute.xlu0 %1272
      %v1274 = vsel %vm570, %v1271, %v1273
      %v1275 = vsel %vm570, %v1273, %v1271
      %v1276 = vmul.f32 %v1274, %v357
      %v1277 = vmul.f32 %v1275, %v358
      %v1278 = vadd.f32 %v1268, %v1276
      %v1279 = vadd.f32 %v1269, %v1277
      %v1280 = vmul.f32 %v1278, 0.11111111
      %v1281 = vmul.f32 %v1279, 0.11111111
      %v1282 = vadd.f32 %v1238, %v1280
      %v1283 = vadd.f32 %v1239, %v1281
      %v1284 = vld [vmem:[%s3] sm:$0xff]
      %1286 = vset.pattern.permute.xlu0 0
      %1287 = vperm.xlu0 %1286, %v1284
      %v1288 = vpop.permute.xlu0 %1287
      %v1290 = vadd.f32 %v1282, %v1288
      %v1291 = vadd.f32 %v1283, %v1288
      %v1292 = vmul.f32 %v1290, 0.2
      %v1293 = vmul.f32 %v1291, 0.2
      %1294 = vst [vmem:[%s332] sm:$0xff] %v1292
      %1295 = vst [vmem:[%s332 + $0x8] sm:$0xff] %v1293
      %p1296 = scmp.lt.s32.totalorder %s20, 1
      %s1297 = scalar_select %p1296, %s20, 1
      %s1298 = smul.addr %s1297, 2
      %s1299 = smul.addr %s1298, 8
      %s1300 = scalar_lea.vmem %s9, %s1299
      // Predicated region
      $region57: #{inception_down_block.1} parent=55 // pred_check
        %p1301 = pneg %p232
      $region58: #{inception_down_block.1} parent=55 // pred_check_branch
        %1303 = sbr.rel (%p1301) target = $region60
      $region59: #{inception_down_block.1} parent=55 // pred_region
        _
      $region60: #{inception_down_block.1} parent=55 // pred_fallthru
        _
    $region56: #{inception_down_block.1} parent=5 // pred_fallthru
      _
    %p1304 = scmp.le.s32.totalorder 2, %s15
    // Predicated region
    $region61: #{inception_down_block.1} parent=5 // pred_check
      %p1305 = pneg %p1304
    $region62: #{inception_down_block.1} parent=5 // pred_check_branch
      %1307 = sbr.rel (%p1305) target = $region64
    $region63: #{inception_down_block.1} parent=5 // pred_region
      %s1308 = ssub.s32 %s15, 2
      // Predicated region
      $region65: #{inception_down_block.1} parent=63 // pred_check
        %p1309 = pneg %p238
      $region66: #{inception_down_block.1} parent=63 // pred_check_branch
        %1311 = sbr.rel (%p1309) target = $region68
      $region67: #{inception_down_block.1} parent=63 // pred_region
        %p1312 = scmp.lt.s32.totalorder %s21, 1
        %s1313 = scalar_select %p1312, %s21, 1
        %s1314 = smul.addr %s1313, 2
        %s1315 = smul.addr %s1314, 8
        %s1316 = scalar_lea.vmem %s9, %s1315
      $region68: #{inception_down_block.1} parent=63 // pred_fallthru
        _
    $region64: #{inception_down_block.1} parent=5 // pred_fallthru
      _
  $region6: #{inception_down_block.1} parent=0 // loop_footer
    %s19 = sadd.s32 1, %s15
  $region7: #{inception_down_block.1} parent=0 // loop_footer_branch
    %14 = sbr.rel target = $region3
  $region8: #{inception_down_block.1} parent=0 // loop_exit
    _

</llo_original>
